<compile_context>
chip_gen: v7x
topology: tpu7x:2x2x1
jax: 0.10.0
libtpu: 0.0.40
codegen_flags: <defaults>
</compile_context>

<pallas_src>
import jax
import jax.numpy as jnp
from jax.experimental import pallas as pl
from jax.experimental.pallas import tpu as pltpu


def _round_up(x, m):
    return (x + m - 1) // m * m


def _vmem_limit_bytes():
    """Generation-aware scoped-VMEM limit: ~75% of physical, capped at 100 MiB."""
    try:
        cap = pltpu.get_tpu_info().vmem_capacity_bytes
        return min(int(cap) * 3 // 4, 100 * 1024 * 1024)
    except Exception:
        return 48 * 1024 * 1024  # safe on every generation (incl. 64 MiB v7x)


def _pick_block_h(h, target, wp, w, c1p, c2p, vmem_budget):
    """Largest TH <= target whose in-kernel footprint fits ~70% of the VMEM budget."""
    th = max(1, min(target, h))

    def footprint(t):
        xbuf = 2 * (t + 2) * wp * c1p * 2       # bf16 double-buffered input strip (+halo)
        outb = 2 * t * w * c2p * 2              # bf16 output block, pipeline double-buffer
        lhs = t * w * 3 * c1p * 2               # bf16 kw-concatenated LHS
        acc = t * w * c2p * 4                   # f32 accumulator
        wts = 2 * 3 * 3 * c1p * c2p * 2         # weights (pipeline double-buffer)
        return xbuf + outb + lhs + acc + wts

    while th > 1 and footprint(th) > vmem_budget * 0.7:
        th -= 1
    return th


def _repconv_kernel(x_hbm, w_ref, b_ref, o_ref, xbuf, sems):
    # x_hbm : (N, Hp+2, Wp, C1p)  bf16 zero-padded input, left in HBM (manual DMA)
    # w_ref : (3, 3*C1p, C2p)     bf16 fused weights; K index = kw*C1p + ci
    # b_ref : (1, C2p)            f32 fused bias
    # o_ref : (1, TH*W, C2p)      bf16 output row strip (lane-dense, flattened rows)
    # xbuf  : (2, TH+2, Wp, C1p)  bf16 double-buffered input strip (+halo)
    # sems  : (2,)                DMA semaphores
    b = pl.program_id(0)
    r = pl.program_id(1)
    nr = pl.num_programs(1)

    th2, wp, c1p = xbuf.shape[1], xbuf.shape[2], xbuf.shape[3]
    th = th2 - 2
    c2p = o_ref.shape[2]
    w_out = o_ref.shape[1] // th

    slot = r % 2

    def strip_copy(row_block, dst_slot):
        # Same descriptor is used for start and wait (src slice matches exactly).
        return pltpu.make_async_copy(
            x_hbm.at[b, pl.ds(row_block * th, th2)],
            xbuf.at[dst_slot],
            sems.at[dst_slot],
        )

    # First strip of this image: fetch our own window.  Per-image self-contained so the
    # batch grid axis can be partitioned across TensorCores on multi-core chips.
    @pl.when(r == 0)
    def _():
        strip_copy(0, slot).start()

    # Prefetch the next strip of the same image into the other buffer.
    @pl.when(r + 1 < nr)
    def _():
        strip_copy(r + 1, 1 - slot).start()

    # Wait for this strip's DMA (descriptor identical to the matching start).
    strip_copy(r, slot).wait()

    # 3 matmuls per strip, one per kh, with kw folded into the contraction dim:
    #   LHS_kh[(h,w), kw*C1p+ci] = x[h+kh, w+kw, ci]   -> (TH*W, 3*C1p) bf16
    #   RHS_kh[kw*C1p+ci, co]    = W[kh, kw, ci, co]   -> (3*C1p, C2p)  bf16
    acc = jnp.zeros((th * w_out, c2p), jnp.float32)
    for kh in range(3):
        rows = xbuf[slot, kh:kh + th]                      # (TH, Wp, C1p) streamed from ref
        lhs = jnp.concatenate(
            [rows[:, kw:kw + w_out, :] for kw in range(3)], axis=-1
        )                                                  # (TH, W, 3*C1p)
        acc = acc + jnp.dot(
            lhs.reshape(th * w_out, 3 * c1p), w_ref[kh],
            preferred_element_type=jnp.float32,
        )

    y = acc + b_ref[...]
    y = y * jax.nn.sigmoid(y)                              # SiLU
    o_ref[0] = y.astype(o_ref.dtype)                       # bf16 writeback


def _fuse_bn(w_oihw, gamma, beta, mean, var, eps=1e-5):
    """Fold eval-mode BatchNorm2d into conv weight (OIHW) and bias."""
    std = jnp.sqrt(var + eps)
    scale = gamma / std
    return w_oihw * scale[:, None, None, None], beta - mean * scale


def repconv_forward(x_nchw, params, block_h=16):
    """RepConv forward. x_nchw: (N, C1, H, W) float32. Returns (N, C2, H, W) float32."""
    w3, bn1, w1, bn2 = params["w3"], params["bn1"], params["w1"], params["bn2"]

    # Fold BN into each branch, then fold the 1x1 branch into the 3x3 center tap.
    w3_f, b3_f = _fuse_bn(w3, *bn1)                  # (C2, C1, 3, 3), (C2,)
    w1_f, b1_f = _fuse_bn(w1, *bn2)                  # (C2, C1, 1, 1), (C2,)
    w3_f = w3_f.at[:, :, 1, 1].add(w1_f[:, :, 0, 0])
    bias = b3_f + b1_f

    N, C1, H, W = x_nchw.shape
    C2 = w3.shape[0]

    C1p = _round_up(C1, 128)              # lane-dense matmul K blocks
    C2p = _round_up(C2, 128)              # lane-dense output channels
    Wp = _round_up(W + 2, 16)             # bf16 sublane packing is (16, 128)

    vmem_budget = _vmem_limit_bytes()
    TH = _pick_block_h(H, block_h, Wp, W, C1p, C2p, vmem_budget)
    Hp = _round_up(H, TH)                 # ragged H handled by padding, TH never degrades
    R = Hp // TH

    # Weights -> (3, 3*C1p, C2p) bf16; contraction index = kw*C1p + ci (matches LHS concat).
    w_hwio = jnp.transpose(w3_f, (2, 3, 1, 0))                                # (3,3,C1,C2)
    w_hwio = jnp.pad(w_hwio, ((0, 0), (0, 0), (0, C1p - C1), (0, C2p - C2)))  # (3,3,C1p,C2p)
    w_cat = w_hwio.reshape(3, 3 * C1p, C2p).astype(jnp.bfloat16)
    bias_p = jnp.pad(bias, (0, C2p - C2)).reshape(1, C2p).astype(jnp.float32)

    # Single relayout pass over x: NCHW->NHWC, 'same' + alignment spatial pad, channel pad,
    # bf16 cast.  (See TODO(synk) at top about dropping this when activations are NHWC/bf16.)
    x_nhwc = jnp.transpose(x_nchw, (0, 2, 3, 1))
    x_pad = jnp.pad(
        x_nhwc, ((0, 0), (1, Hp - H + 1), (1, Wp - (W + 1)), (0, C1p - C1))
    ).astype(jnp.bfloat16)                                                    # (N, Hp+2, Wp, C1p)

    cost = pl.CostEstimate(
        flops=2 * N * H * W * 9 * C1p * C2p,
        transcendentals=N * H * W * C2p,
        bytes_accessed=(N * (Hp + 2) * Wp * C1p * 2      # input (bf16)
                        + 3 * 3 * C1p * C2p * 2          # weights (bf16)
                        + N * Hp * W * C2p * 2),         # output (bf16)
    )

    out = pl.pallas_call(
        _repconv_kernel,
        out_shape=jax.ShapeDtypeStruct((N, Hp * W, C2p), jnp.bfloat16),
        grid_spec=pltpu.PrefetchScalarGridSpec(
            num_scalar_prefetch=0,
            grid=(N, R),
            in_specs=[
                pl.BlockSpec(memory_space=pl.ANY),                           # x stays in HBM
                pl.BlockSpec((3, 3 * C1p, C2p), lambda b, r: (0, 0, 0)),     # weights (resident)
                pl.BlockSpec((1, C2p), lambda b, r: (0, 0)),                 # bias (resident)
            ],
            out_specs=pl.BlockSpec((1, TH * W, C2p), lambda b, r: (b, r, 0)),
            scratch_shapes=[
                pltpu.VMEM((2, TH + 2, Wp, C1p), jnp.bfloat16),              # input double-buffer
                pltpu.SemaphoreType.DMA((2,)),
            ],
        ),
        compiler_params=pltpu.CompilerParams(
            # Batch axis shards across TensorCores (v7x megacore); the row-strip axis is
            # sequential because adjacent strips share the manual double-buffered prefetch.
            dimension_semantics=("parallel", "arbitrary"),
            vmem_limit_bytes=vmem_budget,
        ),
        cost_estimate=cost,
    )(x_pad, w_cat, bias_p)

    # Drop H/channel padding, restore f32 + NCHW to match the module's external interface.
    out = out.reshape(N, Hp, W, C2p)[:, :H, :, :C2].astype(jnp.float32)
    return jnp.transpose(out, (0, 3, 1, 2))


def _reference(x_nchw, params):
    """Pure-JAX reference of the same forward pass (for sanity check)."""
    w3, bn1, w1, bn2 = params["w3"], params["bn1"], params["w1"], params["bn2"]

    def bn_apply(y, gamma, beta, mean, var, eps=1e-5):
        scale = gamma / jnp.sqrt(var + eps)
        return y * scale[None, :, None, None] + (beta - mean * scale)[None, :, None, None]

    dn = jax.lax.conv_dimension_numbers(x_nchw.shape, w3.shape, ("NCHW", "OIHW", "NCHW"))
    y3 = jax.lax.conv_general_dilated(x_nchw, w3, (1, 1), ((1, 1), (1, 1)),
                                      dimension_numbers=dn)
    y1 = jax.lax.conv_general_dilated(x_nchw, w1, (1, 1), ((0, 0), (0, 0)),
                                      dimension_numbers=dn)
    y = bn_apply(y3, *bn1) + bn_apply(y1, *bn2)
    return y * jax.nn.sigmoid(y)


def _init_params(key, c1, c2):
    ks = jax.random.split(key, 8)
    w3 = jax.random.normal(ks[0], (c2, c1, 3, 3), jnp.float32) * 0.2
    w1 = jax.random.normal(ks[1], (c2, c1, 1, 1), jnp.float32) * 0.2
    bn1 = (1.0 + 0.1 * jax.random.normal(ks[2], (c2,), jnp.float32),   # gamma
           0.1 * jax.random.normal(ks[3], (c2,), jnp.float32),         # beta
           0.05 * jax.random.normal(ks[4], (c2,), jnp.float32),        # running_mean
           jnp.abs(1.0 + 0.1 * jax.random.normal(ks[5], (c2,), jnp.float32)))  # running_var
    bn2 = (1.0 + 0.1 * jax.random.normal(ks[6], (c2,), jnp.float32),
           0.1 * jax.random.normal(ks[7], (c2,), jnp.float32),
           jnp.zeros((c2,), jnp.float32),
           jnp.ones((c2,), jnp.float32))
    return {"w3": w3, "bn1": bn1, "w1": w1, "bn2": bn2}


if __name__ == "__main__":
    key = jax.random.PRNGKey(0)
    k_x, k_p = jax.random.split(key)

    N, C1, C2, H, W = 2, 4, 8, 16, 16
    x = jax.random.normal(k_x, (N, C1, H, W), jnp.float32)
    params = _init_params(k_p, C1, C2)

    # block_h=8 -> 2 row strips per image, exercising the double-buffered DMA prefetch.
    out = repconv_forward(x, params, block_h=8)
    out = jax.block_until_ready(out)

    ref = _reference(x, params)
    assert out.shape == (N, C2, H, W)
    max_err = float(jnp.max(jnp.abs(out - ref)))
    # bf16 MXU operands + bf16 output (f32 accumulation) -> loosened tolerance vs f32 ref.
    assert jnp.allclose(out, ref, atol=5e-2, rtol=5e-2), f"mismatch vs reference (max err {max_err})"

    print("KERNEL_OK")
</pallas_src>

<mosaic_0001>
module attributes {stable_mosaic.version = 11 : i64} {
  func.func @_repconv_kernel(%arg0: i32, %arg1: i32, %arg2: memref<2x18x32x128xbf16, #tpu.memory_space<any>>, %arg3: memref<3x384x128xbf16, #tpu.memory_space<vmem>>, %arg4: memref<1x128xf32, #tpu.memory_space<vmem>>, %arg5: memref<1x128x128xbf16, #tpu.memory_space<vmem>>, %arg6: memref<2x10x32x128xbf16, #tpu.memory_space<vmem>>, %arg7: memref<2x!tpu.dma_semaphore, #tpu.memory_space<semaphore_mem>>) attributes {dimension_semantics = [#tpu.dimension_semantics<parallel>, #tpu.dimension_semantics<arbitrary>], iteration_bounds = array<i64: 2, 2>, scalar_prefetch = 0 : i64, scratch_operands = 2 : i64, tpu.core_type = #tpu.core_type<tc>, window_params = [{}, {pipeline_mode = #tpu.pipeline_mode<synchronous>, transform_indices = @transform_1, window_bounds = array<i64: 3, 384, 128>}, {pipeline_mode = #tpu.pipeline_mode<synchronous>, transform_indices = @transform_2, window_bounds = array<i64: 1, 128>}, {transform_indices = @transform_3, window_bounds = array<i64: 1, 128, 128>}]} {
    %c2_i32 = arith.constant 2 : i32
    %c0_i32 = arith.constant 0 : i32
    %0 = arith.cmpi eq, %c2_i32, %c0_i32 : i32
    %c1_i32 = arith.constant 1 : i32
    %1 = arith.select %0, %c1_i32, %c2_i32 : i32
    %2 = arith.remsi %arg1, %1 : i32
    %c0_i32_0 = arith.constant 0 : i32
    %3 = arith.cmpi ne, %2, %c0_i32_0 : i32
    %c0_i32_1 = arith.constant 0 : i32
    %4 = arith.cmpi slt, %2, %c0_i32_1 : i32
    %c0_i32_2 = arith.constant 0 : i32
    %5 = arith.cmpi slt, %1, %c0_i32_2 : i32
    %6 = arith.xori %4, %5 : i1
    %7 = arith.andi %6, %3 : i1
    %8 = arith.addi %2, %1 : i32
    %9 = arith.select %7, %8, %2 : i32
    %c0_i32_3 = arith.constant 0 : i32
    %10 = arith.cmpi eq, %arg1, %c0_i32_3 : i32
    %11 = arith.extui %10 : i1 to i32
    %c0_i32_4 = arith.constant 0 : i32
    %12 = arith.cmpi ne, %11, %c0_i32_4 : i32
    scf.if %12 {
      %c0_i32_37 = arith.constant 0 : i32
      %c0_i32_38 = arith.constant 0 : i32
      %c0_i32_39 = arith.constant 0 : i32
      %74 = tpu.memref_slice %arg2[%arg0, %c0_i32_37, %c0_i32_38, %c0_i32_39] : memref<2x18x32x128xbf16, #tpu.memory_space<any>> -> memref<1x10x32x128xbf16, #tpu.memory_space<any>>
      %75 = tpu.memref_squeeze %74 : memref<1x10x32x128xbf16, #tpu.memory_space<any>> -> memref<10x32x128xbf16, #tpu.memory_space<any>>
      %c0_i32_40 = arith.constant 0 : i32
      %c0_i32_41 = arith.constant 0 : i32
      %c0_i32_42 = arith.constant 0 : i32
      %76 = tpu.memref_slice %arg6[%9, %c0_i32_40, %c0_i32_41, %c0_i32_42] : memref<2x10x32x128xbf16, #tpu.memory_space<vmem>> -> memref<1x10x32x128xbf16, #tpu.memory_space<vmem>>
      %77 = tpu.memref_squeeze %76 : memref<1x10x32x128xbf16, #tpu.memory_space<vmem>> -> memref<10x32x128xbf16, #tpu.memory_space<vmem>>
      %78 = tpu.memref_slice %arg7[%9] : memref<2x!tpu.dma_semaphore, #tpu.memory_space<semaphore_mem>> -> memref<1x!tpu.dma_semaphore, #tpu.memory_space<semaphore_mem>>
      %79 = tpu.memref_squeeze %78 : memref<1x!tpu.dma_semaphore, #tpu.memory_space<semaphore_mem>> -> memref<!tpu.dma_semaphore, #tpu.memory_space<semaphore_mem>>
      tpu.enqueue_dma source(%75 : memref<10x32x128xbf16, #tpu.memory_space<any>>) target(%77 : memref<10x32x128xbf16, #tpu.memory_space<vmem>>) target_semaphore(%79 : memref<!tpu.dma_semaphore, #tpu.memory_space<semaphore_mem>>)
    } else {
    }
    %c1_i32_5 = arith.constant 1 : i32
    %13 = arith.addi %arg1, %c1_i32_5 : i32
    %c2_i32_6 = arith.constant 2 : i32
    %14 = arith.cmpi slt, %13, %c2_i32_6 : i32
    %15 = arith.extui %14 : i1 to i32
    %c0_i32_7 = arith.constant 0 : i32
    %16 = arith.cmpi ne, %15, %c0_i32_7 : i32
    scf.if %16 {
      %c1_i32_37 = arith.constant 1 : i32
      %74 = arith.addi %arg1, %c1_i32_37 : i32
      %c1_i32_38 = arith.constant 1 : i32
      %75 = arith.subi %c1_i32_38, %9 : i32
      %c8_i32_39 = arith.constant 8 : i32
      %76 = arith.muli %74, %c8_i32_39 : i32
      %c0_i32_40 = arith.constant 0 : i32
      %c0_i32_41 = arith.constant 0 : i32
      %77 = tpu.memref_slice %arg2[%arg0, %76, %c0_i32_40, %c0_i32_41] : memref<2x18x32x128xbf16, #tpu.memory_space<any>> -> memref<1x10x32x128xbf16, #tpu.memory_space<any>>
      %78 = tpu.memref_squeeze %77 : memref<1x10x32x128xbf16, #tpu.memory_space<any>> -> memref<10x32x128xbf16, #tpu.memory_space<any>>
      %c0_i32_42 = arith.constant 0 : i32
      %c0_i32_43 = arith.constant 0 : i32
      %c0_i32_44 = arith.constant 0 : i32
      %79 = tpu.memref_slice %arg6[%75, %c0_i32_42, %c0_i32_43, %c0_i32_44] : memref<2x10x32x128xbf16, #tpu.memory_space<vmem>> -> memref<1x10x32x128xbf16, #tpu.memory_space<vmem>>
      %80 = tpu.memref_squeeze %79 : memref<1x10x32x128xbf16, #tpu.memory_space<vmem>> -> memref<10x32x128xbf16, #tpu.memory_space<vmem>>
      %81 = tpu.memref_slice %arg7[%75] : memref<2x!tpu.dma_semaphore, #tpu.memory_space<semaphore_mem>> -> memref<1x!tpu.dma_semaphore, #tpu.memory_space<semaphore_mem>>
      %82 = tpu.memref_squeeze %81 : memref<1x!tpu.dma_semaphore, #tpu.memory_space<semaphore_mem>> -> memref<!tpu.dma_semaphore, #tpu.memory_space<semaphore_mem>>
      tpu.enqueue_dma source(%78 : memref<10x32x128xbf16, #tpu.memory_space<any>>) target(%80 : memref<10x32x128xbf16, #tpu.memory_space<vmem>>) target_semaphore(%82 : memref<!tpu.dma_semaphore, #tpu.memory_space<semaphore_mem>>)
    } else {
    }
    %c8_i32 = arith.constant 8 : i32
    %17 = arith.muli %arg1, %c8_i32 : i32
    %c0_i32_8 = arith.constant 0 : i32
    %c0_i32_9 = arith.constant 0 : i32
    %18 = tpu.memref_slice %arg2[%arg0, %17, %c0_i32_8, %c0_i32_9] : memref<2x18x32x128xbf16, #tpu.memory_space<any>> -> memref<1x10x32x128xbf16, #tpu.memory_space<any>>
    %19 = tpu.memref_squeeze %18 : memref<1x10x32x128xbf16, #tpu.memory_space<any>> -> memref<10x32x128xbf16, #tpu.memory_space<any>>
    %c0_i32_10 = arith.constant 0 : i32
    %c0_i32_11 = arith.constant 0 : i32
    %c0_i32_12 = arith.constant 0 : i32
    %20 = tpu.memref_slice %arg6[%9, %c0_i32_10, %c0_i32_11, %c0_i32_12] : memref<2x10x32x128xbf16, #tpu.memory_space<vmem>> -> memref<1x10x32x128xbf16, #tpu.memory_space<vmem>>
    %21 = tpu.memref_squeeze %20 : memref<1x10x32x128xbf16, #tpu.memory_space<vmem>> -> memref<10x32x128xbf16, #tpu.memory_space<vmem>>
    %22 = tpu.memref_slice %arg7[%9] : memref<2x!tpu.dma_semaphore, #tpu.memory_space<semaphore_mem>> -> memref<1x!tpu.dma_semaphore, #tpu.memory_space<semaphore_mem>>
    %23 = tpu.memref_squeeze %22 : memref<1x!tpu.dma_semaphore, #tpu.memory_space<semaphore_mem>> -> memref<!tpu.dma_semaphore, #tpu.memory_space<semaphore_mem>>
    tpu.wait_dma2 semaphore(%23 : memref<!tpu.dma_semaphore, #tpu.memory_space<semaphore_mem>>) src(%19 : memref<10x32x128xbf16, #tpu.memory_space<any>>) dst(%21 : memref<10x32x128xbf16, #tpu.memory_space<vmem>>)
    %cst = arith.constant 0.000000e+00 : f32
    %24 = vector.broadcast %cst : f32 to vector<128x128xf32>
    %25 = arith.index_cast %9 : i32 to index
    %c0 = arith.constant 0 : index
    %c0_13 = arith.constant 0 : index
    %c0_14 = arith.constant 0 : index
    %26 = vector.load %arg6[%25, %c0, %c0_13, %c0_14] : memref<2x10x32x128xbf16, #tpu.memory_space<vmem>>, vector<1x8x32x128xbf16>
    %27 = vector.shape_cast %26 : vector<1x8x32x128xbf16> to vector<8x32x128xbf16>
    %28 = vector.extract_strided_slice %27 {offsets = [0, 0, 0], sizes = [8, 16, 128], strides = [1, 1, 1]} : vector<8x32x128xbf16> to vector<8x16x128xbf16>
    %29 = vector.extract_strided_slice %27 {offsets = [0, 1, 0], sizes = [8, 16, 128], strides = [1, 1, 1]} : vector<8x32x128xbf16> to vector<8x16x128xbf16>
    %30 = vector.extract_strided_slice %27 {offsets = [0, 2, 0], sizes = [8, 16, 128], strides = [1, 1, 1]} : vector<8x32x128xbf16> to vector<8x16x128xbf16>
    %31 = tpu.concatenate %28, %29, %30 in 2 : vector<8x16x128xbf16>, vector<8x16x128xbf16>, vector<8x16x128xbf16> -> vector<8x16x384xbf16>
    %32 = vector.shape_cast %31 : vector<8x16x384xbf16> to vector<128x384xbf16>
    %c0_15 = arith.constant 0 : index
    %c0_16 = arith.constant 0 : index
    %c0_17 = arith.constant 0 : index
    %33 = vector.load %arg3[%c0_15, %c0_16, %c0_17] : memref<3x384x128xbf16, #tpu.memory_space<vmem>>, vector<1x384x128xbf16>
    %34 = vector.shape_cast %33 : vector<1x384x128xbf16> to vector<384x128xbf16>
    %cst_18 = arith.constant dense<0.000000e+00> : vector<128x128xf32>
    %35 = tpu.matmul %32, %34, %cst_18 {dimension_numbers = #tpu.dot_dimension_numbers<[1], [0], [0], [1], [0, 0, 1, 1], [], []>} : vector<128x384xbf16>, vector<384x128xbf16>, vector<128x128xf32> -> vector<128x128xf32>
    %36 = arith.addf %24, %35 : vector<128x128xf32>
    %37 = arith.index_cast %9 : i32 to index
    %c1 = arith.constant 1 : index
    %c0_19 = arith.constant 0 : index
    %c0_20 = arith.constant 0 : index
    %38 = vector.load %arg6[%37, %c1, %c0_19, %c0_20] : memref<2x10x32x128xbf16, #tpu.memory_space<vmem>>, vector<1x8x32x128xbf16>
    %39 = vector.shape_cast %38 : vector<1x8x32x128xbf16> to vector<8x32x128xbf16>
    %40 = vector.extract_strided_slice %39 {offsets = [0, 0, 0], sizes = [8, 16, 128], strides = [1, 1, 1]} : vector<8x32x128xbf16> to vector<8x16x128xbf16>
    %41 = vector.extract_strided_slice %39 {offsets = [0, 1, 0], sizes = [8, 16, 128], strides = [1, 1, 1]} : vector<8x32x128xbf16> to vector<8x16x128xbf16>
    %42 = vector.extract_strided_slice %39 {offsets = [0, 2, 0], sizes = [8, 16, 128], strides = [1, 1, 1]} : vector<8x32x128xbf16> to vector<8x16x128xbf16>
    %43 = tpu.concatenate %40, %41, %42 in 2 : vector<8x16x128xbf16>, vector<8x16x128xbf16>, vector<8x16x128xbf16> -> vector<8x16x384xbf16>
    %44 = vector.shape_cast %43 : vector<8x16x384xbf16> to vector<128x384xbf16>
    %c1_21 = arith.constant 1 : index
    %c0_22 = arith.constant 0 : index
    %c0_23 = arith.constant 0 : index
    %45 = vector.load %arg3[%c1_21, %c0_22, %c0_23] : memref<3x384x128xbf16, #tpu.memory_space<vmem>>, vector<1x384x128xbf16>
    %46 = vector.shape_cast %45 : vector<1x384x128xbf16> to vector<384x128xbf16>
    %cst_24 = arith.constant dense<0.000000e+00> : vector<128x128xf32>
    %47 = tpu.matmul %44, %46, %cst_24 {dimension_numbers = #tpu.dot_dimension_numbers<[1], [0], [0], [1], [0, 0, 1, 1], [], []>} : vector<128x384xbf16>, vector<384x128xbf16>, vector<128x128xf32> -> vector<128x128xf32>
    %48 = arith.addf %36, %47 : vector<128x128xf32>
    %49 = arith.index_cast %9 : i32 to index
    %c2 = arith.constant 2 : index
    %c0_25 = arith.constant 0 : index
    %c0_26 = arith.constant 0 : index
    %50 = vector.load %arg6[%49, %c2, %c0_25, %c0_26] : memref<2x10x32x128xbf16, #tpu.memory_space<vmem>>, vector<1x8x32x128xbf16>
    %51 = vector.shape_cast %50 : vector<1x8x32x128xbf16> to vector<8x32x128xbf16>
    %52 = vector.extract_strided_slice %51 {offsets = [0, 0, 0], sizes = [8, 16, 128], strides = [1, 1, 1]} : vector<8x32x128xbf16> to vector<8x16x128xbf16>
    %53 = vector.extract_strided_slice %51 {offsets = [0, 1, 0], sizes = [8, 16, 128], strides = [1, 1, 1]} : vector<8x32x128xbf16> to vector<8x16x128xbf16>
    %54 = vector.extract_strided_slice %51 {offsets = [0, 2, 0], sizes = [8, 16, 128], strides = [1, 1, 1]} : vector<8x32x128xbf16> to vector<8x16x128xbf16>
    %55 = tpu.concatenate %52, %53, %54 in 2 : vector<8x16x128xbf16>, vector<8x16x128xbf16>, vector<8x16x128xbf16> -> vector<8x16x384xbf16>
    %56 = vector.shape_cast %55 : vector<8x16x384xbf16> to vector<128x384xbf16>
    %c2_27 = arith.constant 2 : index
    %c0_28 = arith.constant 0 : index
    %c0_29 = arith.constant 0 : index
    %57 = vector.load %arg3[%c2_27, %c0_28, %c0_29] : memref<3x384x128xbf16, #tpu.memory_space<vmem>>, vector<1x384x128xbf16>
    %58 = vector.shape_cast %57 : vector<1x384x128xbf16> to vector<384x128xbf16>
    %cst_30 = arith.constant dense<0.000000e+00> : vector<128x128xf32>
    %59 = tpu.matmul %56, %58, %cst_30 {dimension_numbers = #tpu.dot_dimension_numbers<[1], [0], [0], [1], [0, 0, 1, 1], [], []>} : vector<128x384xbf16>, vector<384x128xbf16>, vector<128x128xf32> -> vector<128x128xf32>
    %60 = arith.addf %48, %59 : vector<128x128xf32>
    %c0_31 = arith.constant 0 : index
    %c0_32 = arith.constant 0 : index
    %61 = vector.load %arg4[%c0_31, %c0_32] : memref<1x128xf32, #tpu.memory_space<vmem>>, vector<1x128xf32>
    %62 = vector.broadcast %61 : vector<1x128xf32> to vector<128x128xf32>
    %63 = arith.addf %60, %62 : vector<128x128xf32>
    %64 = arith.negf %63 : vector<128x128xf32>
    %65 = math.exp %64 : vector<128x128xf32>
    %cst_33 = arith.constant 1.000000e+00 : f32
    %66 = vector.broadcast %cst_33 : f32 to vector<128x128xf32>
    %67 = arith.addf %66, %65 : vector<128x128xf32>
    %68 = arith.divf %66, %67 : vector<128x128xf32>
    %69 = arith.mulf %63, %68 : vector<128x128xf32>
    %70 = arith.truncf %69 : vector<128x128xf32> to vector<128x128xbf16>
    %c0_34 = arith.constant 0 : index
    %c0_35 = arith.constant 0 : index
    %c0_36 = arith.constant 0 : index
    %71 = vector.load %arg5[%c0_34, %c0_35, %c0_36] : memref<1x128x128xbf16, #tpu.memory_space<vmem>>, vector<1x128x128xbf16>
    %72 = vector.shape_cast %71 : vector<1x128x128xbf16> to vector<128x128xbf16>
    %73 = vector.shape_cast %70 : vector<128x128xbf16> to vector<1x128x128xbf16>
    tpu.vector_store %arg5[%c0_34, %c0_35, %c0_36], %73 {strides = array<i32>} : memref<1x128x128xbf16, #tpu.memory_space<vmem>>, vector<1x128x128xbf16>,
    return
  }
  func.func @transform_1(%arg0: i32, %arg1: i32) -> (i32, i32, i32) {
    %c0_i32 = arith.constant 0 : i32
    %c0_i32_0 = arith.constant 0 : i32
    %c0_i32_1 = arith.constant 0 : i32
    %c0_i32_2 = arith.constant 0 : i32
    return %c0_i32, %c0_i32_0, %c0_i32_1 : i32, i32, i32
  }
  func.func @transform_2(%arg0: i32, %arg1: i32) -> (i32, i32) {
    %c0_i32 = arith.constant 0 : i32
    %c0_i32_0 = arith.constant 0 : i32
    %c0_i32_1 = arith.constant 0 : i32
    return %c0_i32, %c0_i32_0 : i32, i32
  }
  func.func @transform_3(%arg0: i32, %arg1: i32) -> (i32, i32, i32) {
    %c0_i32 = arith.constant 0 : i32
    %c0_i32_0 = arith.constant 0 : i32
    return %arg0, %arg1, %c0_i32 : i32, i32, i32
  }
}

</mosaic_0001>

<llo_original>
// kernel: tpu_custom_call.1
$region0: #{tpu_custom_call.1}
  #allocation0 [shape = 'u32[]', space=smem, size = 0x4, offset = 0x4, fixed_abs, tag = 'smem constant byte address 0x4 - core index']
  #allocation1 [shape = 'u32[144,128]{1,0:T(1,128)}', space=vmem, size = 0x12000, scoped, tag = 'internal scratch']
  #allocation2 [shape = 'bf16[2,10,32,128]{3,2,1,0:T(16,128)(2,1)}', space=vmem, size = 0x28000, scoped, tag = 'scratch operand']
  #allocation3 [shape = 's32[2]{0}', space=sflag, size = 0x8, scoped, tag = 'scratch operand']
  #allocation8 [shape = 's32[]', space=sflag, size = 0x4, offset = 0, fixed_abs, tag = 'sflag constant byte address 0x0 - dummy sync flag']
  #allocation9 [shape = 's32[]', space=sflag, size = 0x4, offset = 0, fixed_abs, tag = 'sflag constant byte address 0x0 - dummy sync flag']
  #allocation10 [shape = 'u32[]', space=smem, size = 0x4, offset = 0x44, fixed_abs, tag = 'smem constant byte address 0x44 - assertion arg 0']
  #allocation11 [shape = 'u32[]', space=smem, size = 0x4, offset = 0x48, fixed_abs, tag = 'smem constant byte address 0x48 - assertion arg 1']
  #allocation12 [shape = 's32[]', space=sflag, size = 0x4, offset = 0, fixed_abs, tag = 'sflag constant byte address 0x0 - dummy sync flag']
  #allocation13 [shape = 's32[]', space=sflag, size = 0x4, offset = 0, fixed_abs, tag = 'sflag constant byte address 0x0 - dummy sync flag']
  %s0 = inlined_call_operand.hbm [shape: bf16[2,18,32,128], index: 0, kind: input, shape index: {}]
  %s1 = inlined_call_operand.hbm [shape: bf16[3,384,128], index: 1, kind: input, shape index: {}]
  %s2 = inlined_call_operand.vmem [shape: f32[1,128], index: 2, kind: input, shape index: {}]
  %s3 = inlined_call_operand.hbm [shape: bf16[2,256,128], index: 3, kind: output, shape index: {}]
  %s4 = sld [smem:[#allocation0]]
  $region61: #{tpu_custom_call.1} parent=0
    _
  %s6 = ssub.s32 1, %s4
  %s7 = scalar_select 0, %s6, %s4
  $region1: #{tpu_custom_call.1} parent=0
    #allocation4 [shape = 'u8[294912]{0}', space=vmem, size = 0x48000, scoped, tag = 'input window, operand 1, single buffered']
    #allocation5 [shape = 's32[2]{0}', space=sflag, size = 0x8, scoped, tag = 'scoped memory for tpu_custom_call.1']
    #allocation6 [shape = 's32[2]{0}', space=sflag, size = 0x8, scoped, tag = 'scoped memory for tpu_custom_call.1']
    #allocation7 [shape = 'u8[65536]{0}', space=vmem, size = 0x10000, scoped, tag = 'output window, operand 0']
    %8 = vsyncpa [#allocation5], 0
    %9 = vsyncpa [#allocation6], 0
    %s10 = scalar_lea.sflag [#allocation6], 1
    %11 = vsyncpa %s10, 0
    loop: start=0, step=1, limit=6
    $region2: #{tpu_custom_call.1} parent=1 // loop_pre_header
      _
    $region3: #{tpu_custom_call.1} parent=1 // loop_header
      %s13 = sphi 0, %s17
      %p14 = scmp.ge.s32.totalorder %s13, 6
      %s20 = sphi 0, %s32
      %s21 = sphi 0, %s28
      %s22 = sphi 0, %s20
      %s23 = sphi 0, %s21
      %s24 = sphi 0, %s22
      %s25 = sphi 0, %s23
      %s33 = sphi 0, %s33
      %s35 = sphi 0, %s33
      %s36 = sphi 0, %s35
      %s50 = sphi 0, %s36
      %s54 = sphi 0, %s54
      %s56 = sphi 0, %s54
      %s57 = sphi 0, %s56
      %s71 = sphi 0, %s57
      %s79 = sphi 0, %s81
      %s82 = sphi 0, %s79
      %s83 = sphi 0, %s82
      %s99 = sphi 0, %s83
    $region4: #{tpu_custom_call.1} parent=1 // loop_header_branch
      %16 = sbr.rel (%p14) target = $region8
    $region5: #{tpu_custom_call.1} parent=1 // loop_body
      %s18 = ssub.s32 %s13, 1
      %s19 = ssub.s32 %s13, 2
      %s26 = sadd.s32 1, %s21
      %p27 = scmp.ge.s32.totalorder %s26, 2
      %s28 = scalar_select %p27, 0, %s26
      %s29 = sadd.s32 1, %s20
      %s30 = scalar_select %p27, %s29, %s20
      %p31 = scmp.ge.s32.totalorder %s30, 2
      %s32 = scalar_select %p31, 0, %s30
      %s34 = sadd.s32 %s33, 1
      %p37 = scmp.eq.s32.totalorder %s13, 3
      %p38 = scmp.ne.s32.totalorder %s33, %s35
      %p39 = scmp.eq.s32.totalorder %s13, 0
      %p40 = por %p38, %p39
      %p41 = scmp.ne.s32.totalorder %s33, %s35
      %p42 = scmp.eq.s32.totalorder %s18, 3
      %p43 = por %p41, %p42
      %p44 = scmp.ne.s32.totalorder %s35, %s36
      %p45 = scmp.eq.s32.totalorder %s18, 0
      %p46 = por %p44, %p45
      %p47 = scmp.ne.s32.totalorder %s35, %s36
      %p48 = scmp.eq.s32.totalorder %s19, 3
      %p49 = por %p47, %p48
      %p51 = scmp.ne.s32.totalorder %s36, %s50
      %p52 = scmp.eq.s32.totalorder %s19, 0
      %p53 = por %p51, %p52
      %s55 = sadd.s32 %s54, 1
      %p58 = scmp.eq.s32.totalorder %s13, 3
      %p59 = scmp.ne.s32.totalorder %s54, %s56
      %p60 = scmp.eq.s32.totalorder %s13, 0
      %p61 = por %p59, %p60
      %p62 = scmp.ne.s32.totalorder %s54, %s56
      %p63 = scmp.eq.s32.totalorder %s18, 3
      %p64 = por %p62, %p63
      %p65 = scmp.ne.s32.totalorder %s56, %s57
      %p66 = scmp.eq.s32.totalorder %s18, 0
      %p67 = por %p65, %p66
      %p68 = scmp.ne.s32.totalorder %s56, %s57
      %p69 = scmp.eq.s32.totalorder %s19, 3
      %p70 = por %p68, %p69
      %p72 = scmp.ne.s32.totalorder %s57, %s71
      %p73 = scmp.eq.s32.totalorder %s19, 0
      %p74 = por %p72, %p73
      %s75 = ssub.s32 %s20, %s32
      %s76 = ssub.s32 %s21, %s28
      %s77 = sor.u32 %s75, %s76
      %p78 = scmp.eq.s32.totalorder %s77, 0
      %s80 = sadd.s32 %s79, 1
      %s81 = scalar_select %p78, %s79, %s80
      %p84 = pneg %p78
      %p85 = scmp.eq.s32.totalorder %s13, 3
      %p86 = por %p84, %p85
      %p87 = scmp.ne.s32.totalorder %s79, %s82
      %p88 = scmp.eq.s32.totalorder %s13, 0
      %p89 = por %p87, %p88
      %p90 = scmp.ne.s32.totalorder %s79, %s82
      %p91 = scmp.eq.s32.totalorder %s18, 3
      %p92 = por %p90, %p91
      %p93 = scmp.ne.s32.totalorder %s82, %s83
      %p94 = scmp.eq.s32.totalorder %s18, 0
      %p95 = por %p93, %p94
      %p96 = scmp.ne.s32.totalorder %s82, %s83
      %p97 = scmp.eq.s32.totalorder %s19, 3
      %p98 = por %p96, %p97
      %p100 = scmp.ne.s32.totalorder %s83, %s99
      %p101 = scmp.eq.s32.totalorder %s19, 0
      %p102 = por %p100, %p101
      %p103 = scmp.le.s32.totalorder 1, %s13
      %p104 = scmp.lt.s32.totalorder %s13, 5
      %p105 = pnand %p103, %p104
      %p106 = pneg %p105
      // Predicated region
      $region9: #{tpu_custom_call.1} parent=5 // pred_check
        _
      $region10: #{tpu_custom_call.1} parent=5 // pred_check_branch
        %108 = sbr.rel (%p105) target = $region12
      $region11: #{tpu_custom_call.1} parent=5 // pred_region
        %s109 = ssub.s32 %s13, 1
        // Predicated region
        $region13: #{tpu_custom_call.1} parent=11 // pred_check
          %p110 = pneg %p46
        $region14: #{tpu_custom_call.1} parent=11 // pred_check_branch
          %112 = sbr.rel (%p110) target = $region16
        $region15: #{tpu_custom_call.1} parent=11 // pred_region
          %s114 = ssub.s32 9216, 9216
          %115 = vsyncadd [#allocation5], %s114
          %s116 = sshll.u32 [#allocation4], 4
          %s117 = int_to_ptr.vmem [resolvable:$true] %s116
          %122 = dma.hbm_to_vmem [thread:$0]  %s1, 9216, %s117, [#allocation5], 64, 64, 4
        $region16: #{tpu_custom_call.1} parent=11 // pred_fallthru
          _
        // Predicated region
        $region17: #{tpu_custom_call.1} parent=11 // pred_check
          %p123 = pneg %p67
        $region18: #{tpu_custom_call.1} parent=11 // pred_check_branch
          %125 = sbr.rel (%p123) target = $region20
        $region19: #{tpu_custom_call.1} parent=11 // pred_region
          _
        $region20: #{tpu_custom_call.1} parent=11 // pred_fallthru
          _
      $region12: #{tpu_custom_call.1} parent=5 // pred_fallthru
        _
      %p126 = scmp.lt.s32.totalorder %s13, 4
      // Predicated region
      $region21: #{tpu_custom_call.1} parent=5 // pred_check
        %p127 = pneg %p126
      $region22: #{tpu_custom_call.1} parent=5 // pred_check_branch
        %129 = sbr.rel (%p127) target = $region24
      $region23: #{tpu_custom_call.1} parent=5 // pred_region
        _
      $region24: #{tpu_custom_call.1} parent=5 // pred_fallthru
        _
      %p130 = scmp.le.s32.totalorder 1, %s13
      %p131 = scmp.lt.s32.totalorder %s13, 5
      %p132 = pnand %p130, %p131
      %p133 = pneg %p132
      // Predicated region
      $region25: #{tpu_custom_call.1} parent=5 // pred_check
        _
      $region26: #{tpu_custom_call.1} parent=5 // pred_check_branch
        %135 = sbr.rel (%p132) target = $region28
      $region27: #{tpu_custom_call.1} parent=5 // pred_region
        %s136 = ssub.s32 %s13, 1
        // Predicated region
        $region29: #{tpu_custom_call.1} parent=27 // pred_check
          %p137 = pneg %p46
        $region30: #{tpu_custom_call.1} parent=27 // pred_check_branch
          %139 = sbr.rel (%p137) target = $region32
        $region31: #{tpu_custom_call.1} parent=27 // pred_region
          %140 = dma.done [#allocation5], 9216
        $region32: #{tpu_custom_call.1} parent=27 // pred_fallthru
          _
        %p141 = pneg %p46
        %p142 = pneg %p43
        %p143 = pneg %p67
        %p144 = pneg %p64
        %p145 = pneg %p95
        %p146 = pneg %p92
        %s147 = sand.u32 %s82, 1
        %s148 = scalar_lea.sflag [#allocation6], %s147
        %s149 = sand.u32 %s82, 1
        %s150 = smul.addr %s149, 64
        %s151 = scalar_lea.vmem [#allocation7], %s150
        %s152 = smul.u32 16, %s23
        %p154 = scmp.lt.s32.totalorder %s23, 0
        %s155 = ssub.s32 0, %s23
        %s156 = scalar_select %p154, %s155, %s23
        %s157 = sand.u32 %s156, 1
        %s158 = ssub.s32 0, %s157
        %s159 = scalar_select %p154, %s158, %s157
        %p160 = scmp.ne.s32.totalorder %s159, 0
        %p161 = scmp.lt.s32.totalorder %s159, 0
        %p162 = pnand %p161, %p160
        %p163 = pneg %p162
        %s164 = sadd.s32 %s159, 2
        %s165 = scalar_select %p163, %s164, %s159
        %p166 = scmp.eq.s32.totalorder %s23, 0
        // Predicated region
        $region33: #{tpu_custom_call.1} parent=27 // pred_check
          %p167 = pneg %p166
        $region34: #{tpu_custom_call.1} parent=27 // pred_check_branch
          %169 = sbr.rel (%p167) target = $region36
        $region35: #{tpu_custom_call.1} parent=27 // pred_region
          %s170 = smul.u32 %s22, 72
          %s171 = smul.addr %s170, 64
          %s172 = scalar_lea.hbm %s0, %s171
          %s173 = smul.u32 %s165, 20
          %s174 = smul.addr %s173, 8
          %s175 = scalar_lea.vmem [#allocation2], %s174
          %s176 = scalar_lea.sflag [#allocation3], %s165
          // Predicated region
          $region37: #{tpu_custom_call.1} parent=35 // pred_check
            _
          $region38: #{tpu_custom_call.1} parent=35 // pred_check_branch
            %178 = sbr.rel target = $region40
          $region39: #{tpu_custom_call.1} parent=35 // pred_region
            %179 = sst [smem:[#allocation10]] [#allocation9]
            %180 = sst [smem:[#allocation11]] [#allocation8]
          $region40: #{tpu_custom_call.1} parent=35 // pred_fallthru
            _
          %182 = shalt.err (0)
          %s184 = sshll.u32 %s175, 4
          %s185 = int_to_ptr.vmem [resolvable:$true] %s184
          %187 = dma.hbm_to_vmem [thread:$0]  %s172, 2560, %s185, %s176
        $region36: #{tpu_custom_call.1} parent=27 // pred_fallthru
          _
        %s188 = sadd.s32 %s23, 1
        %p189 = scmp.lt.s32.totalorder %s188, 2
        // Predicated region
        $region41: #{tpu_custom_call.1} parent=27 // pred_check
          %p190 = pneg %p189
        $region42: #{tpu_custom_call.1} parent=27 // pred_check_branch
          %192 = sbr.rel (%p190) target = $region44
        $region43: #{tpu_custom_call.1} parent=27 // pred_region
          %s193 = ssub.s32 1, %s165
          %s194 = smul.u32 %s188, 8
          %s195 = smul.u32 %s194, 4
          %s196 = smul.u32 %s22, 72
          %s197 = sadd.s32 %s195, %s196
          %s198 = smul.addr %s197, 64
          %s199 = scalar_lea.hbm %s0, %s198
          %s200 = smul.u32 %s193, 20
          %s201 = smul.addr %s200, 8
          %s202 = scalar_lea.vmem [#allocation2], %s201
          %s203 = scalar_lea.sflag [#allocation3], %s193
          // Predicated region
          $region45: #{tpu_custom_call.1} parent=43 // pred_check
            _
          $region46: #{tpu_custom_call.1} parent=43 // pred_check_branch
            %205 = sbr.rel target = $region48
          $region47: #{tpu_custom_call.1} parent=43 // pred_region
            %206 = sst [smem:[#allocation10]] [#allocation13]
            %207 = sst [smem:[#allocation11]] [#allocation12]
          $region48: #{tpu_custom_call.1} parent=43 // pred_fallthru
            _
          %209 = shalt.err (0)
          %s211 = sshll.u32 %s202, 4
          %s212 = int_to_ptr.vmem [resolvable:$true] %s211
          %214 = dma.hbm_to_vmem [thread:$0]  %s199, 2560, %s212, %s203
        $region44: #{tpu_custom_call.1} parent=27 // pred_fallthru
          _
        %s215 = scalar_lea.sflag [#allocation3], %s165
        %s216 = smul.u32 4, 10
        %s217 = smul.u32 %s216, 4
        %s218 = smul.u32 %s217, 1
        %s219 = sshll.u32 %s218, 4
        %220 = dma.done %s215, %s219
        %s221 = smul.u32 %s165, 20
        %s222 = smul.addr %s221, 8
        %s223 = scalar_lea.vmem [#allocation2], %s222
        %v224 = vld [vmem:[%s223] sm:$0xff]
        %v225 = vld [vmem:[%s223 + $0x8] sm:$0xff]
        %v226 = vld [vmem:[%s223 + $0x10] sm:$0xff]
        %v227 = vld [vmem:[%s223 + $0x18] sm:$0xff]
        %v228 = vld [vmem:[%s223 + $0x20] sm:$0xff]
        %v229 = vld [vmem:[%s223 + $0x28] sm:$0xff]
        %v230 = vld [vmem:[%s223 + $0x30] sm:$0xff]
        %v231 = vld [vmem:[%s223 + $0x38] sm:$0xff]
        %v232 = vld [vmem:[%s223 + $0x40] sm:$0xff]
        %v233 = vld [vmem:[%s223 + $0x48] sm:$0xff]
        %v234 = vld [vmem:[%s223 + $0x50] sm:$0xff]
        %v235 = vld [vmem:[%s223 + $0x58] sm:$0xff]
        %v236 = vld [vmem:[%s223 + $0x60] sm:$0xff]
        %v237 = vld [vmem:[%s223 + $0x68] sm:$0xff]
        %v238 = vld [vmem:[%s223 + $0x70] sm:$0xff]
        %v239 = vld [vmem:[%s223 + $0x78] sm:$0xff]
        %vm240 = vsmask.f32 7424
        %v242 = vshrl.u32 %v224, 16
        %v244 = vshll.u32 %v224, 16
        %v246 = vrot.slane %v244, 1
        %v247 = vor.u32 %v242, %v246
        %v249 = vshll.u32 %v225, 16
        %v251 = vrot.slane %v249, 1
        %v252 = vsel %vm240, %v247, %v251
        %v254 = vshrl.u32 %v226, 16
        %v256 = vshll.u32 %v226, 16
        %v258 = vrot.slane %v256, 1
        %v259 = vor.u32 %v254, %v258
        %v261 = vshll.u32 %v227, 16
        %v263 = vrot.slane %v261, 1
        %v264 = vsel %vm240, %v259, %v263
        %v266 = vshrl.u32 %v228, 16
        %v268 = vshll.u32 %v228, 16
        %v270 = vrot.slane %v268, 1
        %v271 = vor.u32 %v266, %v270
        %v273 = vshll.u32 %v229, 16
        %v275 = vrot.slane %v273, 1
        %v276 = vsel %vm240, %v271, %v275
        %v278 = vshrl.u32 %v230, 16
        %v280 = vshll.u32 %v230, 16
        %v282 = vrot.slane %v280, 1
        %v283 = vor.u32 %v278, %v282
        %v285 = vshll.u32 %v231, 16
        %v287 = vrot.slane %v285, 1
        %v288 = vsel %vm240, %v283, %v287
        %v290 = vshrl.u32 %v232, 16
        %v292 = vshll.u32 %v232, 16
        %v294 = vrot.slane %v292, 1
        %v295 = vor.u32 %v290, %v294
        %v297 = vshll.u32 %v233, 16
        %v299 = vrot.slane %v297, 1
        %v300 = vsel %vm240, %v295, %v299
        %v302 = vshrl.u32 %v234, 16
        %v304 = vshll.u32 %v234, 16
        %v306 = vrot.slane %v304, 1
        %v307 = vor.u32 %v302, %v306
        %v309 = vshll.u32 %v235, 16
        %v311 = vrot.slane %v309, 1
        %v312 = vsel %vm240, %v307, %v311
        %v314 = vshrl.u32 %v236, 16
        %v316 = vshll.u32 %v236, 16
        %v318 = vrot.slane %v316, 1
        %v319 = vor.u32 %v314, %v318
        %v321 = vshll.u32 %v237, 16
        %v323 = vrot.slane %v321, 1
        %v324 = vsel %vm240, %v319, %v323
        %v326 = vshrl.u32 %v238, 16
        %v328 = vshll.u32 %v238, 16
        %v330 = vrot.slane %v328, 1
        %v331 = vor.u32 %v326, %v330
        %v333 = vshll.u32 %v239, 16
        %v335 = vrot.slane %v333, 1
        %v336 = vsel %vm240, %v331, %v335
        %vm361 = vcmask 1046528
        %v362 = vrot.slane %v224, 1
        %v363 = vrot.slane %v225, 1
        %v364 = vsel %vm361, %v362, %v363
        %v365 = vrot.slane %v226, 1
        %v366 = vrot.slane %v227, 1
        %v367 = vsel %vm361, %v365, %v366
        %v368 = vrot.slane %v228, 1
        %v369 = vrot.slane %v229, 1
        %v370 = vsel %vm361, %v368, %v369
        %v371 = vrot.slane %v230, 1
        %v372 = vrot.slane %v231, 1
        %v373 = vsel %vm361, %v371, %v372
        %v374 = vrot.slane %v232, 1
        %v375 = vrot.slane %v233, 1
        %v376 = vsel %vm361, %v374, %v375
        %v377 = vrot.slane %v234, 1
        %v378 = vrot.slane %v235, 1
        %v379 = vsel %vm361, %v377, %v378
        %v380 = vrot.slane %v236, 1
        %v381 = vrot.slane %v237, 1
        %v382 = vsel %vm361, %v380, %v381
        %v383 = vrot.slane %v238, 1
        %v384 = vrot.slane %v239, 1
        %v385 = vsel %vm361, %v383, %v384
        %v394 = vld [vmem:[#allocation4] sm:$0xf]
        %v395 = vld [vmem:[#allocation4 + $0x4] sm:$0xf]
        %v396 = vld [vmem:[#allocation4 + $0x8] sm:$0xf]
        %v397 = vld [vmem:[#allocation4 + $0xc] sm:$0xf]
        %v398 = vld [vmem:[#allocation4 + $0x10] sm:$0xf]
        %v399 = vld [vmem:[#allocation4 + $0x14] sm:$0xf]
        %v400 = vld [vmem:[#allocation4 + $0x18] sm:$0xf]
        %v401 = vld [vmem:[#allocation4 + $0x1c] sm:$0xf]
        %v402 = vld [vmem:[#allocation4 + $0x20] sm:$0xf]
        %v403 = vld [vmem:[#allocation4 + $0x24] sm:$0xf]
        %v404 = vld [vmem:[#allocation4 + $0x28] sm:$0xf]
        %v405 = vld [vmem:[#allocation4 + $0x2c] sm:$0xf]
        %v406 = vld [vmem:[#allocation4 + $0x30] sm:$0xf]
        %v407 = vld [vmem:[#allocation4 + $0x34] sm:$0xf]
        %v408 = vld [vmem:[#allocation4 + $0x38] sm:$0xf]
        %v409 = vld [vmem:[#allocation4 + $0x3c] sm:$0xf]
        %v410 = vld [vmem:[#allocation4 + $0x40] sm:$0xf]
        %v411 = vld [vmem:[#allocation4 + $0x44] sm:$0xf]
        %v412 = vld [vmem:[#allocation4 + $0x48] sm:$0xf]
        %v413 = vld [vmem:[#allocation4 + $0x4c] sm:$0xf]
        %v414 = vld [vmem:[#allocation4 + $0x50] sm:$0xf]
        %v415 = vld [vmem:[#allocation4 + $0x54] sm:$0xf]
        %v416 = vld [vmem:[#allocation4 + $0x58] sm:$0xf]
        %v417 = vld [vmem:[#allocation4 + $0x5c] sm:$0xf]
        %v418 = vld [vmem:[#allocation4 + $0x60] sm:$0xf]
        %v419 = vld [vmem:[#allocation4 + $0x64] sm:$0xf]
        %v420 = vld [vmem:[#allocation4 + $0x68] sm:$0xf]
        %v421 = vld [vmem:[#allocation4 + $0x6c] sm:$0xf]
        %v422 = vld [vmem:[#allocation4 + $0x70] sm:$0xf]
        %v423 = vld [vmem:[#allocation4 + $0x74] sm:$0xf]
        %v424 = vld [vmem:[#allocation4 + $0x78] sm:$0xf]
        %v425 = vld [vmem:[#allocation4 + $0x7c] sm:$0xf]
        %v426 = vld [vmem:[#allocation4 + $0x80] sm:$0xf]
        %v427 = vld [vmem:[#allocation4 + $0x84] sm:$0xf]
        %v428 = vld [vmem:[#allocation4 + $0x88] sm:$0xf]
        %v429 = vld [vmem:[#allocation4 + $0x8c] sm:$0xf]
        %v430 = vld [vmem:[#allocation4 + $0x90] sm:$0xf]
        %v431 = vld [vmem:[#allocation4 + $0x94] sm:$0xf]
        %v432 = vld [vmem:[#allocation4 + $0x98] sm:$0xf]
        %v433 = vld [vmem:[#allocation4 + $0x9c] sm:$0xf]
        %v434 = vld [vmem:[#allocation4 + $0xa0] sm:$0xf]
        %v435 = vld [vmem:[#allocation4 + $0xa4] sm:$0xf]
        %v436 = vld [vmem:[#allocation4 + $0xa8] sm:$0xf]
        %v437 = vld [vmem:[#allocation4 + $0xac] sm:$0xf]
        %v438 = vld [vmem:[#allocation4 + $0xb0] sm:$0xf]
        %v439 = vld [vmem:[#allocation4 + $0xb4] sm:$0xf]
        %v440 = vld [vmem:[#allocation4 + $0xb8] sm:$0xf]
        %v441 = vld [vmem:[#allocation4 + $0xbc] sm:$0xf]
        %s442 = sadd.s32 2, %s221
        %s443 = smul.addr %s442, 8
        %s444 = scalar_lea.vmem [#allocation2], %s443
        %v445 = vld [vmem:[%s444] sm:$0xff]
        %v446 = vld [vmem:[%s444 + $0x8] sm:$0xff]
        %v447 = vld [vmem:[%s444 + $0x10] sm:$0xff]
        %v448 = vld [vmem:[%s444 + $0x18] sm:$0xff]
        %v449 = vld [vmem:[%s444 + $0x20] sm:$0xff]
        %v450 = vld [vmem:[%s444 + $0x28] sm:$0xff]
        %v451 = vld [vmem:[%s444 + $0x30] sm:$0xff]
        %v452 = vld [vmem:[%s444 + $0x38] sm:$0xff]
        %v453 = vld [vmem:[%s444 + $0x40] sm:$0xff]
        %v454 = vld [vmem:[%s444 + $0x48] sm:$0xff]
        %v455 = vld [vmem:[%s444 + $0x50] sm:$0xff]
        %v456 = vld [vmem:[%s444 + $0x58] sm:$0xff]
        %v457 = vld [vmem:[%s444 + $0x60] sm:$0xff]
        %v458 = vld [vmem:[%s444 + $0x68] sm:$0xff]
        %v459 = vld [vmem:[%s444 + $0x70] sm:$0xff]
        %v460 = vld [vmem:[%s444 + $0x78] sm:$0xff]
        %v462 = vshrl.u32 %v445, 16
        %v464 = vshll.u32 %v445, 16
        %v466 = vrot.slane %v464, 1
        %v467 = vor.u32 %v462, %v466
        %v469 = vshll.u32 %v446, 16
        %v471 = vrot.slane %v469, 1
        %v472 = vsel %vm240, %v467, %v471
        %v474 = vshrl.u32 %v447, 16
        %v476 = vshll.u32 %v447, 16
        %v478 = vrot.slane %v476, 1
        %v479 = vor.u32 %v474, %v478
        %v481 = vshll.u32 %v448, 16
        %v483 = vrot.slane %v481, 1
        %v484 = vsel %vm240, %v479, %v483
        %v486 = vshrl.u32 %v449, 16
        %v488 = vshll.u32 %v449, 16
        %v490 = vrot.slane %v488, 1
        %v491 = vor.u32 %v486, %v490
        %v493 = vshll.u32 %v450, 16
        %v495 = vrot.slane %v493, 1
        %v496 = vsel %vm240, %v491, %v495
        %v498 = vshrl.u32 %v451, 16
        %v500 = vshll.u32 %v451, 16
        %v502 = vrot.slane %v500, 1
        %v503 = vor.u32 %v498, %v502
        %v505 = vshll.u32 %v452, 16
        %v507 = vrot.slane %v505, 1
        %v508 = vsel %vm240, %v503, %v507
        %v510 = vshrl.u32 %v453, 16
        %v512 = vshll.u32 %v453, 16
        %v514 = vrot.slane %v512, 1
        %v515 = vor.u32 %v510, %v514
        %v517 = vshll.u32 %v454, 16
        %v519 = vrot.slane %v517, 1
        %v520 = vsel %vm240, %v515, %v519
        %v522 = vshrl.u32 %v455, 16
        %v524 = vshll.u32 %v455, 16
        %v526 = vrot.slane %v524, 1
        %v527 = vor.u32 %v522, %v526
        %v529 = vshll.u32 %v456, 16
        %v531 = vrot.slane %v529, 1
        %v532 = vsel %vm240, %v527, %v531
        %v534 = vshrl.u32 %v457, 16
        %v536 = vshll.u32 %v457, 16
        %v538 = vrot.slane %v536, 1
        %v539 = vor.u32 %v534, %v538
        %v541 = vshll.u32 %v458, 16
        %v543 = vrot.slane %v541, 1
        %v544 = vsel %vm240, %v539, %v543
        %v546 = vshrl.u32 %v459, 16
        %v548 = vshll.u32 %v459, 16
        %v550 = vrot.slane %v548, 1
        %v551 = vor.u32 %v546, %v550
        %v553 = vshll.u32 %v460, 16
        %v555 = vrot.slane %v553, 1
        %v556 = vsel %vm240, %v551, %v555
        %v581 = vrot.slane %v445, 1
        %v582 = vrot.slane %v446, 1
        %v583 = vsel %vm361, %v581, %v582
        %v584 = vrot.slane %v447, 1
        %v585 = vrot.slane %v448, 1
        %v586 = vsel %vm361, %v584, %v585
        %v587 = vrot.slane %v449, 1
        %v588 = vrot.slane %v450, 1
        %v589 = vsel %vm361, %v587, %v588
        %v590 = vrot.slane %v451, 1
        %v591 = vrot.slane %v452, 1
        %v592 = vsel %vm361, %v590, %v591
        %v593 = vrot.slane %v453, 1
        %v594 = vrot.slane %v454, 1
        %v595 = vsel %vm361, %v593, %v594
        %v596 = vrot.slane %v455, 1
        %v597 = vrot.slane %v456, 1
        %v598 = vsel %vm361, %v596, %v597
        %v599 = vrot.slane %v457, 1
        %v600 = vrot.slane %v458, 1
        %v601 = vsel %vm361, %v599, %v600
        %v602 = vrot.slane %v459, 1
        %v603 = vrot.slane %v460, 1
        %v604 = vsel %vm361, %v602, %v603
        %s613 = scalar_lea.vmem [#allocation4], 192
        %v614 = vld [vmem:[%s613] sm:$0xf]
        %v615 = vld [vmem:[%s613 + $0x4] sm:$0xf]
        %v616 = vld [vmem:[%s613 + $0x8] sm:$0xf]
        %v617 = vld [vmem:[%s613 + $0xc] sm:$0xf]
        %v618 = vld [vmem:[%s613 + $0x10] sm:$0xf]
        %v619 = vld [vmem:[%s613 + $0x14] sm:$0xf]
        %v620 = vld [vmem:[%s613 + $0x18] sm:$0xf]
        %v621 = vld [vmem:[%s613 + $0x1c] sm:$0xf]
        %v622 = vld [vmem:[%s613 + $0x20] sm:$0xf]
        %v623 = vld [vmem:[%s613 + $0x24] sm:$0xf]
        %v624 = vld [vmem:[%s613 + $0x28] sm:$0xf]
        %v625 = vld [vmem:[%s613 + $0x2c] sm:$0xf]
        %v626 = vld [vmem:[%s613 + $0x30] sm:$0xf]
        %v627 = vld [vmem:[%s613 + $0x34] sm:$0xf]
        %v628 = vld [vmem:[%s613 + $0x38] sm:$0xf]
        %v629 = vld [vmem:[%s613 + $0x3c] sm:$0xf]
        %v630 = vld [vmem:[%s613 + $0x40] sm:$0xf]
        %v631 = vld [vmem:[%s613 + $0x44] sm:$0xf]
        %v632 = vld [vmem:[%s613 + $0x48] sm:$0xf]
        %v633 = vld [vmem:[%s613 + $0x4c] sm:$0xf]
        %v634 = vld [vmem:[%s613 + $0x50] sm:$0xf]
        %v635 = vld [vmem:[%s613 + $0x54] sm:$0xf]
        %v636 = vld [vmem:[%s613 + $0x58] sm:$0xf]
        %v637 = vld [vmem:[%s613 + $0x5c] sm:$0xf]
        %v638 = vld [vmem:[%s613 + $0x60] sm:$0xf]
        %v639 = vld [vmem:[%s613 + $0x64] sm:$0xf]
        %v640 = vld [vmem:[%s613 + $0x68] sm:$0xf]
        %v641 = vld [vmem:[%s613 + $0x6c] sm:$0xf]
        %v642 = vld [vmem:[%s613 + $0x70] sm:$0xf]
        %v643 = vld [vmem:[%s613 + $0x74] sm:$0xf]
        %v644 = vld [vmem:[%s613 + $0x78] sm:$0xf]
        %v645 = vld [vmem:[%s613 + $0x7c] sm:$0xf]
        %v646 = vld [vmem:[%s613 + $0x80] sm:$0xf]
        %v647 = vld [vmem:[%s613 + $0x84] sm:$0xf]
        %v648 = vld [vmem:[%s613 + $0x88] sm:$0xf]
        %v649 = vld [vmem:[%s613 + $0x8c] sm:$0xf]
        %v650 = vld [vmem:[%s613 + $0x90] sm:$0xf]
        %v651 = vld [vmem:[%s613 + $0x94] sm:$0xf]
        %v652 = vld [vmem:[%s613 + $0x98] sm:$0xf]
        %v653 = vld [vmem:[%s613 + $0x9c] sm:$0xf]
        %v654 = vld [vmem:[%s613 + $0xa0] sm:$0xf]
        %v655 = vld [vmem:[%s613 + $0xa4] sm:$0xf]
        %v656 = vld [vmem:[%s613 + $0xa8] sm:$0xf]
        %v657 = vld [vmem:[%s613 + $0xac] sm:$0xf]
        %v658 = vld [vmem:[%s613 + $0xb0] sm:$0xf]
        %v659 = vld [vmem:[%s613 + $0xb4] sm:$0xf]
        %v660 = vld [vmem:[%s613 + $0xb8] sm:$0xf]
        %v661 = vld [vmem:[%s613 + $0xbc] sm:$0xf]
        %v710 = vunpack.c.l.b16 %v614
        %v711 = vunpack.c.l.b16 %v615
        %v712 = vunpack.c.l.b16 %v616
        %v713 = vunpack.c.l.b16 %v617
        %v714 = vunpack.c.l.b16 %v618
        %v715 = vunpack.c.l.b16 %v619
        %v716 = vunpack.c.l.b16 %v620
        %v717 = vunpack.c.l.b16 %v621
        %v718 = vunpack.c.l.b16 %v622
        %v719 = vunpack.c.l.b16 %v623
        %v720 = vunpack.c.l.b16 %v624
        %v721 = vunpack.c.l.b16 %v625
        %v722 = vunpack.c.l.b16 %v626
        %v723 = vunpack.c.l.b16 %v627
        %v724 = vunpack.c.l.b16 %v628
        %v725 = vunpack.c.l.b16 %v629
        %v726 = vunpack.c.l.b16 %v630
        %v727 = vunpack.c.l.b16 %v631
        %v728 = vunpack.c.l.b16 %v632
        %v729 = vunpack.c.l.b16 %v633
        %v730 = vunpack.c.l.b16 %v634
        %v731 = vunpack.c.l.b16 %v635
        %v732 = vunpack.c.l.b16 %v636
        %v733 = vunpack.c.l.b16 %v637
        %v734 = vunpack.c.l.b16 %v638
        %v735 = vunpack.c.l.b16 %v639
        %v736 = vunpack.c.l.b16 %v640
        %v737 = vunpack.c.l.b16 %v641
        %v738 = vunpack.c.l.b16 %v642
        %v739 = vunpack.c.l.b16 %v643
        %v740 = vunpack.c.l.b16 %v644
        %v741 = vunpack.c.l.b16 %v645
        %v742 = vunpack.c.l.b16 %v646
        %v743 = vunpack.c.l.b16 %v647
        %v744 = vunpack.c.l.b16 %v648
        %v745 = vunpack.c.l.b16 %v649
        %v746 = vunpack.c.l.b16 %v650
        %v747 = vunpack.c.l.b16 %v651
        %v748 = vunpack.c.l.b16 %v652
        %v749 = vunpack.c.l.b16 %v653
        %v750 = vunpack.c.l.b16 %v654
        %v751 = vunpack.c.l.b16 %v655
        %v752 = vunpack.c.l.b16 %v656
        %v753 = vunpack.c.l.b16 %v657
        %v754 = vunpack.c.l.b16 %v658
        %v755 = vunpack.c.l.b16 %v659
        %v756 = vunpack.c.l.b16 %v660
        %v757 = vunpack.c.l.b16 %v661
        %v758 = vpack.c.b16 %v711, %v710
        %v759 = vpack.c.b16 %v713, %v712
        %v760 = vpack.c.b16 %v715, %v714
        %v761 = vpack.c.b16 %v717, %v716
        %v762 = vpack.c.b16 %v719, %v718
        %v763 = vpack.c.b16 %v721, %v720
        %v764 = vpack.c.b16 %v723, %v722
        %v765 = vpack.c.b16 %v725, %v724
        %v766 = vpack.c.b16 %v727, %v726
        %v767 = vpack.c.b16 %v729, %v728
        %v768 = vpack.c.b16 %v731, %v730
        %v769 = vpack.c.b16 %v733, %v732
        %v770 = vpack.c.b16 %v735, %v734
        %v771 = vpack.c.b16 %v737, %v736
        %v772 = vpack.c.b16 %v739, %v738
        %v773 = vpack.c.b16 %v741, %v740
        %v774 = vpack.c.b16 %v743, %v742
        %v775 = vpack.c.b16 %v745, %v744
        %v776 = vpack.c.b16 %v747, %v746
        %v777 = vpack.c.b16 %v749, %v748
        %v778 = vpack.c.b16 %v751, %v750
        %v779 = vpack.c.b16 %v753, %v752
        %v780 = vpack.c.b16 %v755, %v754
        %v781 = vpack.c.b16 %v757, %v756
        %806 = vmatprep.subr.bf16.mxu0 0
        %807 = vmatpush1.bf16.msra.mxu0 %v758
        %808 = vmatprep.subr.bf16.mxu0 0
        %809 = vmatpush1.bf16.msra.mxu0 %v759
        %810 = vmatprep.subr.bf16.mxu0 0
        %811 = vmatpush1.bf16.msra.mxu0 %v760
        %812 = vmatprep.subr.bf16.mxu0 0
        %813 = vmatpush1.bf16.msra.mxu0 %v761
        %814 = vmatprep.subr.bf16.mxu0 0
        %815 = vmatpush1.bf16.msra.mxu0 %v762
        %816 = vmatprep.subr.bf16.mxu0 0
        %817 = vmatpush1.bf16.msra.mxu0 %v763
        %818 = vmatprep.subr.bf16.mxu0 0
        %819 = vmatpush1.bf16.msra.mxu0 %v764
        %820 = vmatprep.subr.bf16.mxu0 0
        %821 = vmatpush1.bf16.msra.mxu0 %v765
        %822 = vmatprep.subr.bf16.mxu0 0
        %823 = vmatpush1.bf16.msra.mxu0 %v766
        %824 = vmatprep.subr.bf16.mxu0 0
        %825 = vmatpush1.bf16.msra.mxu0 %v767
        %826 = vmatprep.subr.bf16.mxu0 0
        %827 = vmatpush1.bf16.msra.mxu0 %v768
        %828 = vmatprep.subr.bf16.mxu0 0
        %829 = vmatpush1.bf16.msra.mxu0 %v769
        %830 = vmatprep.subr.bf16.mxu0 0
        %831 = vmatpush1.bf16.msra.mxu0 %v770
        %832 = vmatprep.subr.bf16.mxu0 0
        %833 = vmatpush1.bf16.msra.mxu0 %v771
        %834 = vmatprep.subr.bf16.mxu0 0
        %835 = vmatpush1.bf16.msra.mxu0 %v772
        %836 = vmatprep.subr.bf16.mxu0 0
        %837 = vmatpush1.bf16.msra.mxu0 %v773
        %838 = vmatprep.mubr.bf16.mxu0 %v472
        %839 = vmatmul.mubr.bf16.gmra.mrb[0].mxu0 %v445
        %v840 = vpop.f32.mrb[0].mxu0
        %v841 = vadd.f32 0.0, %v840
        %v842 = vpop.f32.mrb[0].mxu0
        %v843 = vpop.f32.mrb[0].mxu0
        %v844 = vadd.f32 0.0, %v843
        %v845 = vpop.f32.mrb[0].mxu0
        %846 = vmatprep.mubr.bf16.mxu0 %v484
        %847 = vmatmul.mubr.bf16.gmra.mrb[0].mxu0 %v447
        %v848 = vpop.f32.mrb[0].mxu0
        %v849 = vadd.f32 0.0, %v848
        %v850 = vpop.f32.mrb[0].mxu0
        %v851 = vpop.f32.mrb[0].mxu0
        %v852 = vadd.f32 0.0, %v851
        %v853 = vpop.f32.mrb[0].mxu0
        %854 = vmatprep.mubr.bf16.mxu0 %v496
        %855 = vmatmul.mubr.bf16.gmra.mrb[0].mxu0 %v449
        %v856 = vpop.f32.mrb[0].mxu0
        %v857 = vadd.f32 0.0, %v856
        %v858 = vpop.f32.mrb[0].mxu0
        %v859 = vpop.f32.mrb[0].mxu0
        %v860 = vadd.f32 0.0, %v859
        %v861 = vpop.f32.mrb[0].mxu0
        %862 = vmatprep.mubr.bf16.mxu0 %v508
        %863 = vmatmul.mubr.bf16.gmra.mrb[0].mxu0 %v451
        %v864 = vpop.f32.mrb[0].mxu0
        %v865 = vadd.f32 0.0, %v864
        %v866 = vpop.f32.mrb[0].mxu0
        %v867 = vpop.f32.mrb[0].mxu0
        %v868 = vadd.f32 0.0, %v867
        %v869 = vpop.f32.mrb[0].mxu0
        %870 = vmatprep.mubr.bf16.mxu0 %v520
        %871 = vmatmul.mubr.bf16.gmra.mrb[0].mxu0 %v453
        %v872 = vpop.f32.mrb[0].mxu0
        %v873 = vadd.f32 0.0, %v872
        %v874 = vpop.f32.mrb[0].mxu0
        %v875 = vpop.f32.mrb[0].mxu0
        %v876 = vadd.f32 0.0, %v875
        %v877 = vpop.f32.mrb[0].mxu0
        %878 = vmatprep.mubr.bf16.mxu0 %v532
        %879 = vmatmul.mubr.bf16.gmra.mrb[0].mxu0 %v455
        %v880 = vpop.f32.mrb[0].mxu0
        %v881 = vadd.f32 0.0, %v880
        %v882 = vpop.f32.mrb[0].mxu0
        %v883 = vpop.f32.mrb[0].mxu0
        %v884 = vadd.f32 0.0, %v883
        %v885 = vpop.f32.mrb[0].mxu0
        %886 = vmatprep.mubr.bf16.mxu0 %v544
        %887 = vmatmul.mubr.bf16.gmra.mrb[0].mxu0 %v457
        %v888 = vpop.f32.mrb[0].mxu0
        %v889 = vadd.f32 0.0, %v888
        %v890 = vpop.f32.mrb[0].mxu0
        %v891 = vpop.f32.mrb[0].mxu0
        %v892 = vadd.f32 0.0, %v891
        %v893 = vpop.f32.mrb[0].mxu0
        %894 = vmatprep.mubr.bf16.mxu0 %v556
        %895 = vmatmul.mubr.bf16.gmra.mrb[0].mxu0 %v459
        %v896 = vpop.f32.mrb[0].mxu0
        %v897 = vadd.f32 0.0, %v896
        %v898 = vpop.f32.mrb[0].mxu0
        %v899 = vpop.f32.mrb[0].mxu0
        %v900 = vadd.f32 0.0, %v899
        %v901 = vpop.f32.mrb[0].mxu0
        %902 = vdwg.mxu0
        %903 = vmatprep.subr.bf16.mxu0 0
        %904 = vmatpush1.bf16.msra.mxu0 %v774
        %905 = vmatprep.subr.bf16.mxu0 0
        %906 = vmatpush1.bf16.msra.mxu0 %v775
        %907 = vmatprep.subr.bf16.mxu0 0
        %908 = vmatpush1.bf16.msra.mxu0 %v776
        %909 = vmatprep.subr.bf16.mxu0 0
        %910 = vmatpush1.bf16.msra.mxu0 %v777
        %911 = vmatprep.subr.bf16.mxu0 0
        %912 = vmatpush1.bf16.msra.mxu0 %v778
        %913 = vmatprep.subr.bf16.mxu0 0
        %914 = vmatpush1.bf16.msra.mxu0 %v779
        %915 = vmatprep.subr.bf16.mxu0 0
        %916 = vmatpush1.bf16.msra.mxu0 %v780
        %917 = vmatprep.subr.bf16.mxu0 0
        %918 = vmatpush1.bf16.msra.mxu0 %v781
        %919 = vmatprep.subr.bf16.mxu0 0
        %920 = vmatpush1.bf16.msra.mxu0 0
        %921 = vmatprep.subr.bf16.mxu0 0
        %922 = vmatpush1.bf16.msra.mxu0 0
        %923 = vmatprep.subr.bf16.mxu0 0
        %924 = vmatpush1.bf16.msra.mxu0 0
        %925 = vmatprep.subr.bf16.mxu0 0
        %926 = vmatpush1.bf16.msra.mxu0 0
        %927 = vmatprep.subr.bf16.mxu0 0
        %928 = vmatpush1.bf16.msra.mxu0 0
        %929 = vmatprep.subr.bf16.mxu0 0
        %930 = vmatpush1.bf16.msra.mxu0 0
        %931 = vmatprep.subr.bf16.mxu0 0
        %932 = vmatpush1.bf16.msra.mxu0 0
        %933 = vmatprep.subr.bf16.mxu0 0
        %934 = vmatpush1.bf16.msra.mxu0 0
        %935 = vmatprep.mubr.bf16.mxu0 0
        %936 = vmatmul.mubr.bf16.gmra.mrb[0].mxu0 %v583
        %v937 = vpop.f32.mrb[0].mxu0
        %v938 = vadd.f32 %v841, %v937
        %v939 = vpop.f32.mrb[0].mxu0
        %v940 = vpop.f32.mrb[0].mxu0
        %v941 = vadd.f32 %v844, %v940
        %v942 = vpop.f32.mrb[0].mxu0
        %943 = vmatprep.mubr.bf16.mxu0 0
        %944 = vmatmul.mubr.bf16.gmra.mrb[0].mxu0 %v586
        %v945 = vpop.f32.mrb[0].mxu0
        %v946 = vadd.f32 %v849, %v945
        %v947 = vpop.f32.mrb[0].mxu0
        %v948 = vpop.f32.mrb[0].mxu0
        %v949 = vadd.f32 %v852, %v948
        %v950 = vpop.f32.mrb[0].mxu0
        %951 = vmatprep.mubr.bf16.mxu0 0
        %952 = vmatmul.mubr.bf16.gmra.mrb[0].mxu0 %v589
        %v953 = vpop.f32.mrb[0].mxu0
        %v954 = vadd.f32 %v857, %v953
        %v955 = vpop.f32.mrb[0].mxu0
        %v956 = vpop.f32.mrb[0].mxu0
        %v957 = vadd.f32 %v860, %v956
        %v958 = vpop.f32.mrb[0].mxu0
        %959 = vmatprep.mubr.bf16.mxu0 0
        %960 = vmatmul.mubr.bf16.gmra.mrb[0].mxu0 %v592
        %v961 = vpop.f32.mrb[0].mxu0
        %v962 = vadd.f32 %v865, %v961
        %v963 = vpop.f32.mrb[0].mxu0
        %v964 = vpop.f32.mrb[0].mxu0
        %v965 = vadd.f32 %v868, %v964
        %v966 = vpop.f32.mrb[0].mxu0
        %967 = vmatprep.mubr.bf16.mxu0 0
        %968 = vmatmul.mubr.bf16.gmra.mrb[0].mxu0 %v595
        %v969 = vpop.f32.mrb[0].mxu0
        %v970 = vadd.f32 %v873, %v969
        %v971 = vpop.f32.mrb[0].mxu0
        %v972 = vpop.f32.mrb[0].mxu0
        %v973 = vadd.f32 %v876, %v972
        %v974 = vpop.f32.mrb[0].mxu0
        %975 = vmatprep.mubr.bf16.mxu0 0
        %976 = vmatmul.mubr.bf16.gmra.mrb[0].mxu0 %v598
        %v977 = vpop.f32.mrb[0].mxu0
        %v978 = vadd.f32 %v881, %v977
        %v979 = vpop.f32.mrb[0].mxu0
        %v980 = vpop.f32.mrb[0].mxu0
        %v981 = vadd.f32 %v884, %v980
        %v982 = vpop.f32.mrb[0].mxu0
        %983 = vmatprep.mubr.bf16.mxu0 0
        %984 = vmatmul.mubr.bf16.gmra.mrb[0].mxu0 %v601
        %v985 = vpop.f32.mrb[0].mxu0
        %v986 = vadd.f32 %v889, %v985
        %v987 = vpop.f32.mrb[0].mxu0
        %v988 = vpop.f32.mrb[0].mxu0
        %v989 = vadd.f32 %v892, %v988
        %v990 = vpop.f32.mrb[0].mxu0
        %991 = vmatprep.mubr.bf16.mxu0 0
        %992 = vmatmul.mubr.bf16.gmra.mrb[0].mxu0 %v604
        %v993 = vpop.f32.mrb[0].mxu0
        %v994 = vadd.f32 %v897, %v993
        %v995 = vpop.f32.mrb[0].mxu0
        %v996 = vpop.f32.mrb[0].mxu0
        %v997 = vadd.f32 %v900, %v996
        %v998 = vpop.f32.mrb[0].mxu0
        %999 = vdwg.mxu0
        %v1048 = vunpack.c.l.b16 %v394
        %v1049 = vunpack.c.l.b16 %v395
        %v1050 = vunpack.c.l.b16 %v396
        %v1051 = vunpack.c.l.b16 %v397
        %v1052 = vunpack.c.l.b16 %v398
        %v1053 = vunpack.c.l.b16 %v399
        %v1054 = vunpack.c.l.b16 %v400
        %v1055 = vunpack.c.l.b16 %v401
        %v1056 = vunpack.c.l.b16 %v402
        %v1057 = vunpack.c.l.b16 %v403
        %v1058 = vunpack.c.l.b16 %v404
        %v1059 = vunpack.c.l.b16 %v405
        %v1060 = vunpack.c.l.b16 %v406
        %v1061 = vunpack.c.l.b16 %v407
        %v1062 = vunpack.c.l.b16 %v408
        %v1063 = vunpack.c.l.b16 %v409
        %v1064 = vunpack.c.l.b16 %v410
        %v1065 = vunpack.c.l.b16 %v411
        %v1066 = vunpack.c.l.b16 %v412
        %v1067 = vunpack.c.l.b16 %v413
        %v1068 = vunpack.c.l.b16 %v414
        %v1069 = vunpack.c.l.b16 %v415
        %v1070 = vunpack.c.l.b16 %v416
        %v1071 = vunpack.c.l.b16 %v417
        %v1072 = vunpack.c.l.b16 %v418
        %v1073 = vunpack.c.l.b16 %v419
        %v1074 = vunpack.c.l.b16 %v420
        %v1075 = vunpack.c.l.b16 %v421
        %v1076 = vunpack.c.l.b16 %v422
        %v1077 = vunpack.c.l.b16 %v423
        %v1078 = vunpack.c.l.b16 %v424
        %v1079 = vunpack.c.l.b16 %v425
        %v1080 = vunpack.c.l.b16 %v426
        %v1081 = vunpack.c.l.b16 %v427
        %v1082 = vunpack.c.l.b16 %v428
        %v1083 = vunpack.c.l.b16 %v429
        %v1084 = vunpack.c.l.b16 %v430
        %v1085 = vunpack.c.l.b16 %v431
        %v1086 = vunpack.c.l.b16 %v432
        %v1087 = vunpack.c.l.b16 %v433
        %v1088 = vunpack.c.l.b16 %v434
        %v1089 = vunpack.c.l.b16 %v435
        %v1090 = vunpack.c.l.b16 %v436
        %v1091 = vunpack.c.l.b16 %v437
        %v1092 = vunpack.c.l.b16 %v438
        %v1093 = vunpack.c.l.b16 %v439
        %v1094 = vunpack.c.l.b16 %v440
        %v1095 = vunpack.c.l.b16 %v441
        %v1096 = vpack.c.b16 %v1049, %v1048
        %v1097 = vpack.c.b16 %v1051, %v1050
        %v1098 = vpack.c.b16 %v1053, %v1052
        %v1099 = vpack.c.b16 %v1055, %v1054
        %v1100 = vpack.c.b16 %v1057, %v1056
        %v1101 = vpack.c.b16 %v1059, %v1058
        %v1102 = vpack.c.b16 %v1061, %v1060
        %v1103 = vpack.c.b16 %v1063, %v1062
        %v1104 = vpack.c.b16 %v1065, %v1064
        %v1105 = vpack.c.b16 %v1067, %v1066
        %v1106 = vpack.c.b16 %v1069, %v1068
        %v1107 = vpack.c.b16 %v1071, %v1070
        %v1108 = vpack.c.b16 %v1073, %v1072
        %v1109 = vpack.c.b16 %v1075, %v1074
        %v1110 = vpack.c.b16 %v1077, %v1076
        %v1111 = vpack.c.b16 %v1079, %v1078
        %v1112 = vpack.c.b16 %v1081, %v1080
        %v1113 = vpack.c.b16 %v1083, %v1082
        %v1114 = vpack.c.b16 %v1085, %v1084
        %v1115 = vpack.c.b16 %v1087, %v1086
        %v1116 = vpack.c.b16 %v1089, %v1088
        %v1117 = vpack.c.b16 %v1091, %v1090
        %v1118 = vpack.c.b16 %v1093, %v1092
        %v1119 = vpack.c.b16 %v1095, %v1094
        %1144 = vmatprep.subr.bf16.mxu0 0
        %1145 = vmatpush1.bf16.msra.mxu0 %v1096
        %1146 = vmatprep.subr.bf16.mxu0 0
        %1147 = vmatpush1.bf16.msra.mxu0 %v1097
        %1148 = vmatprep.subr.bf16.mxu0 0
        %1149 = vmatpush1.bf16.msra.mxu0 %v1098
        %1150 = vmatprep.subr.bf16.mxu0 0
        %1151 = vmatpush1.bf16.msra.mxu0 %v1099
        %1152 = vmatprep.subr.bf16.mxu0 0
        %1153 = vmatpush1.bf16.msra.mxu0 %v1100
        %1154 = vmatprep.subr.bf16.mxu0 0
        %1155 = vmatpush1.bf16.msra.mxu0 %v1101
        %1156 = vmatprep.subr.bf16.mxu0 0
        %1157 = vmatpush1.bf16.msra.mxu0 %v1102
        %1158 = vmatprep.subr.bf16.mxu0 0
        %1159 = vmatpush1.bf16.msra.mxu0 %v1103
        %1160 = vmatprep.subr.bf16.mxu0 0
        %1161 = vmatpush1.bf16.msra.mxu0 %v1104
        %1162 = vmatprep.subr.bf16.mxu0 0
        %1163 = vmatpush1.bf16.msra.mxu0 %v1105
        %1164 = vmatprep.subr.bf16.mxu0 0
        %1165 = vmatpush1.bf16.msra.mxu0 %v1106
        %1166 = vmatprep.subr.bf16.mxu0 0
        %1167 = vmatpush1.bf16.msra.mxu0 %v1107
        %1168 = vmatprep.subr.bf16.mxu0 0
        %1169 = vmatpush1.bf16.msra.mxu0 %v1108
        %1170 = vmatprep.subr.bf16.mxu0 0
        %1171 = vmatpush1.bf16.msra.mxu0 %v1109
        %1172 = vmatprep.subr.bf16.mxu0 0
        %1173 = vmatpush1.bf16.msra.mxu0 %v1110
        %1174 = vmatprep.subr.bf16.mxu0 0
        %1175 = vmatpush1.bf16.msra.mxu0 %v1111
        %1176 = vmatprep.mubr.bf16.mxu0 %v252
        %1177 = vmatmul.mubr.bf16.gmra.mrb[0].mxu0 %v224
        %v1178 = vpop.f32.mrb[0].mxu0
        %v1179 = vadd.f32 %v938, %v1178
        %v1180 = vpop.f32.mrb[0].mxu0
        %v1181 = vpop.f32.mrb[0].mxu0
        %v1182 = vadd.f32 %v941, %v1181
        %v1183 = vpop.f32.mrb[0].mxu0
        %1184 = vmatprep.mubr.bf16.mxu0 %v264
        %1185 = vmatmul.mubr.bf16.gmra.mrb[0].mxu0 %v226
        %v1186 = vpop.f32.mrb[0].mxu0
        %v1187 = vadd.f32 %v946, %v1186
        %v1188 = vpop.f32.mrb[0].mxu0
        %v1189 = vpop.f32.mrb[0].mxu0
        %v1190 = vadd.f32 %v949, %v1189
        %v1191 = vpop.f32.mrb[0].mxu0
        %1192 = vmatprep.mubr.bf16.mxu0 %v276
        %1193 = vmatmul.mubr.bf16.gmra.mrb[0].mxu0 %v228
        %v1194 = vpop.f32.mrb[0].mxu0
        %v1195 = vadd.f32 %v954, %v1194
        %v1196 = vpop.f32.mrb[0].mxu0
        %v1197 = vpop.f32.mrb[0].mxu0
        %v1198 = vadd.f32 %v957, %v1197
        %v1199 = vpop.f32.mrb[0].mxu0
        %1200 = vmatprep.mubr.bf16.mxu0 %v288
        %1201 = vmatmul.mubr.bf16.gmra.mrb[0].mxu0 %v230
        %v1202 = vpop.f32.mrb[0].mxu0
        %v1203 = vadd.f32 %v962, %v1202
        %v1204 = vpop.f32.mrb[0].mxu0
        %v1205 = vpop.f32.mrb[0].mxu0
        %v1206 = vadd.f32 %v965, %v1205
        %v1207 = vpop.f32.mrb[0].mxu0
        %1208 = vmatprep.mubr.bf16.mxu0 %v300
        %1209 = vmatmul.mubr.bf16.gmra.mrb[0].mxu0 %v232
        %v1210 = vpop.f32.mrb[0].mxu0
        %v1211 = vadd.f32 %v970, %v1210
        %v1212 = vpop.f32.mrb[0].mxu0
        %v1213 = vpop.f32.mrb[0].mxu0
        %v1214 = vadd.f32 %v973, %v1213
        %v1215 = vpop.f32.mrb[0].mxu0
        %1216 = vmatprep.mubr.bf16.mxu0 %v312
        %1217 = vmatmul.mubr.bf16.gmra.mrb[0].mxu0 %v234
        %v1218 = vpop.f32.mrb[0].mxu0
        %v1219 = vadd.f32 %v978, %v1218
        %v1220 = vpop.f32.mrb[0].mxu0
        %v1221 = vpop.f32.mrb[0].mxu0
        %v1222 = vadd.f32 %v981, %v1221
        %v1223 = vpop.f32.mrb[0].mxu0
        %1224 = vmatprep.mubr.bf16.mxu0 %v324
        %1225 = vmatmul.mubr.bf16.gmra.mrb[0].mxu0 %v236
        %v1226 = vpop.f32.mrb[0].mxu0
        %v1227 = vadd.f32 %v986, %v1226
        %v1228 = vpop.f32.mrb[0].mxu0
        %v1229 = vpop.f32.mrb[0].mxu0
        %v1230 = vadd.f32 %v989, %v1229
        %v1231 = vpop.f32.mrb[0].mxu0
        %1232 = vmatprep.mubr.bf16.mxu0 %v336
        %1233 = vmatmul.mubr.bf16.gmra.mrb[0].mxu0 %v238
        %v1234 = vpop.f32.mrb[0].mxu0
        %v1235 = vadd.f32 %v994, %v1234
        %v1236 = vpop.f32.mrb[0].mxu0
        %v1237 = vpop.f32.mrb[0].mxu0
        %v1238 = vadd.f32 %v997, %v1237
        %v1239 = vpop.f32.mrb[0].mxu0
        %1240 = vdwg.mxu0
        %1241 = vmatprep.subr.bf16.mxu0 0
        %1242 = vmatpush1.bf16.msra.mxu0 %v1112
        %1243 = vmatprep.subr.bf16.mxu0 0
        %1244 = vmatpush1.bf16.msra.mxu0 %v1113
        %1245 = vmatprep.subr.bf16.mxu0 0
        %1246 = vmatpush1.bf16.msra.mxu0 %v1114
        %1247 = vmatprep.subr.bf16.mxu0 0
        %1248 = vmatpush1.bf16.msra.mxu0 %v1115
        %1249 = vmatprep.subr.bf16.mxu0 0
        %1250 = vmatpush1.bf16.msra.mxu0 %v1116
        %1251 = vmatprep.subr.bf16.mxu0 0
        %1252 = vmatpush1.bf16.msra.mxu0 %v1117
        %1253 = vmatprep.subr.bf16.mxu0 0
        %1254 = vmatpush1.bf16.msra.mxu0 %v1118
        %1255 = vmatprep.subr.bf16.mxu0 0
        %1256 = vmatpush1.bf16.msra.mxu0 %v1119
        %1257 = vmatprep.subr.bf16.mxu0 0
        %1258 = vmatpush1.bf16.msra.mxu0 0
        %1259 = vmatprep.subr.bf16.mxu0 0
        %1260 = vmatpush1.bf16.msra.mxu0 0
        %1261 = vmatprep.subr.bf16.mxu0 0
        %1262 = vmatpush1.bf16.msra.mxu0 0
        %1263 = vmatprep.subr.bf16.mxu0 0
        %1264 = vmatpush1.bf16.msra.mxu0 0
        %1265 = vmatprep.subr.bf16.mxu0 0
        %1266 = vmatpush1.bf16.msra.mxu0 0
        %1267 = vmatprep.subr.bf16.mxu0 0
        %1268 = vmatpush1.bf16.msra.mxu0 0
        %1269 = vmatprep.subr.bf16.mxu0 0
        %1270 = vmatpush1.bf16.msra.mxu0 0
        %1271 = vmatprep.subr.bf16.mxu0 0
        %1272 = vmatpush1.bf16.msra.mxu0 0
        %1273 = vmatprep.mubr.bf16.mxu0 0
        %1274 = vmatmul.mubr.bf16.gmra.mrb[0].mxu0 %v364
        %v1275 = vpop.f32.mrb[0].mxu0
        %v1276 = vadd.f32 %v1179, %v1275
        %v1277 = vpop.f32.mrb[0].mxu0
        %v1278 = vpop.f32.mrb[0].mxu0
        %v1279 = vadd.f32 %v1182, %v1278
        %v1280 = vpop.f32.mrb[0].mxu0
        %1281 = vmatprep.mubr.bf16.mxu0 0
        %1282 = vmatmul.mubr.bf16.gmra.mrb[0].mxu0 %v367
        %v1283 = vpop.f32.mrb[0].mxu0
        %v1284 = vadd.f32 %v1187, %v1283
        %v1285 = vpop.f32.mrb[0].mxu0
        %v1286 = vpop.f32.mrb[0].mxu0
        %v1287 = vadd.f32 %v1190, %v1286
        %v1288 = vpop.f32.mrb[0].mxu0
        %1289 = vmatprep.mubr.bf16.mxu0 0
        %1290 = vmatmul.mubr.bf16.gmra.mrb[0].mxu0 %v370
        %v1291 = vpop.f32.mrb[0].mxu0
        %v1292 = vadd.f32 %v1195, %v1291
        %v1293 = vpop.f32.mrb[0].mxu0
        %v1294 = vpop.f32.mrb[0].mxu0
        %v1295 = vadd.f32 %v1198, %v1294
        %v1296 = vpop.f32.mrb[0].mxu0
        %1297 = vmatprep.mubr.bf16.mxu0 0
        %1298 = vmatmul.mubr.bf16.gmra.mrb[0].mxu0 %v373
        %v1299 = vpop.f32.mrb[0].mxu0
        %v1300 = vadd.f32 %v1203, %v1299
        %v1301 = vpop.f32.mrb[0].mxu0
        %v1302 = vpop.f32.mrb[0].mxu0
        %v1303 = vadd.f32 %v1206, %v1302
        %v1304 = vpop.f32.mrb[0].mxu0
        %1305 = vmatprep.mubr.bf16.mxu0 0
        %1306 = vmatmul.mubr.bf16.gmra.mrb[0].mxu0 %v376
        %v1307 = vpop.f32.mrb[0].mxu0
        %v1308 = vadd.f32 %v1211, %v1307
        %v1309 = vpop.f32.mrb[0].mxu0
        %v1310 = vpop.f32.mrb[0].mxu0
        %v1311 = vadd.f32 %v1214, %v1310
        %v1312 = vpop.f32.mrb[0].mxu0
        %1313 = vmatprep.mubr.bf16.mxu0 0
        %1314 = vmatmul.mubr.bf16.gmra.mrb[0].mxu0 %v379
        %v1315 = vpop.f32.mrb[0].mxu0
        %v1316 = vadd.f32 %v1219, %v1315
        %v1317 = vpop.f32.mrb[0].mxu0
        %v1318 = vpop.f32.mrb[0].mxu0
        %v1319 = vadd.f32 %v1222, %v1318
        %v1320 = vpop.f32.mrb[0].mxu0
        %1321 = vmatprep.mubr.bf16.mxu0 0
        %1322 = vmatmul.mubr.bf16.gmra.mrb[0].mxu0 %v382
        %v1323 = vpop.f32.mrb[0].mxu0
        %v1324 = vadd.f32 %v1227, %v1323
        %v1325 = vpop.f32.mrb[0].mxu0
        %v1326 = vpop.f32.mrb[0].mxu0
        %v1327 = vadd.f32 %v1230, %v1326
        %v1328 = vpop.f32.mrb[0].mxu0
        %1329 = vmatprep.mubr.bf16.mxu0 0
        %1330 = vmatmul.mubr.bf16.gmra.mrb[0].mxu0 %v385
        %v1331 = vpop.f32.mrb[0].mxu0
        %v1332 = vadd.f32 %v1235, %v1331
        %v1333 = vpop.f32.mrb[0].mxu0
        %v1334 = vpop.f32.mrb[0].mxu0
        %v1335 = vadd.f32 %v1238, %v1334
        %v1336 = vpop.f32.mrb[0].mxu0
        %1337 = vdwg.mxu0
        %s1338 = sadd.s32 4, %s221
        %s1339 = smul.addr %s1338, 8
        %s1340 = scalar_lea.vmem [#allocation2], %s1339
        %v1341 = vld [vmem:[%s1340] sm:$0xff]
        %v1342 = vld [vmem:[%s1340 + $0x8] sm:$0xff]
        %v1343 = vld [vmem:[%s1340 + $0x10] sm:$0xff]
        %v1344 = vld [vmem:[%s1340 + $0x18] sm:$0xff]
        %v1345 = vld [vmem:[%s1340 + $0x20] sm:$0xff]
        %v1346 = vld [vmem:[%s1340 + $0x28] sm:$0xff]
        %v1347 = vld [vmem:[%s1340 + $0x30] sm:$0xff]
        %v1348 = vld [vmem:[%s1340 + $0x38] sm:$0xff]
        %v1349 = vld [vmem:[%s1340 + $0x40] sm:$0xff]
        %v1350 = vld [vmem:[%s1340 + $0x48] sm:$0xff]
        %v1351 = vld [vmem:[%s1340 + $0x50] sm:$0xff]
        %v1352 = vld [vmem:[%s1340 + $0x58] sm:$0xff]
        %v1353 = vld [vmem:[%s1340 + $0x60] sm:$0xff]
        %v1354 = vld [vmem:[%s1340 + $0x68] sm:$0xff]
        %v1355 = vld [vmem:[%s1340 + $0x70] sm:$0xff]
        %v1356 = vld [vmem:[%s1340 + $0x78] sm:$0xff]
        %v1358 = vshrl.u32 %v1341, 16
        %v1360 = vshll.u32 %v1341, 16
        %v1362 = vrot.slane %v1360, 1
        %v1363 = vor.u32 %v1358, %v1362
        %v1365 = vshll.u32 %v1342, 16
        %v1367 = vrot.slane %v1365, 1
        %v1368 = vsel %vm240, %v1363, %v1367
        %v1370 = vshrl.u32 %v1343, 16
        %v1372 = vshll.u32 %v1343, 16
        %v1374 = vrot.slane %v1372, 1
        %v1375 = vor.u32 %v1370, %v1374
        %v1377 = vshll.u32 %v1344, 16
        %v1379 = vrot.slane %v1377, 1
        %v1380 = vsel %vm240, %v1375, %v1379
        %v1382 = vshrl.u32 %v1345, 16
        %v1384 = vshll.u32 %v1345, 16
        %v1386 = vrot.slane %v1384, 1
        %v1387 = vor.u32 %v1382, %v1386
        %v1389 = vshll.u32 %v1346, 16
        %v1391 = vrot.slane %v1389, 1
        %v1392 = vsel %vm240, %v1387, %v1391
        %v1394 = vshrl.u32 %v1347, 16
        %v1396 = vshll.u32 %v1347, 16
        %v1398 = vrot.slane %v1396, 1
        %v1399 = vor.u32 %v1394, %v1398
        %v1401 = vshll.u32 %v1348, 16
        %v1403 = vrot.slane %v1401, 1
        %v1404 = vsel %vm240, %v1399, %v1403
        %v1406 = vshrl.u32 %v1349, 16
        %v1408 = vshll.u32 %v1349, 16
        %v1410 = vrot.slane %v1408, 1
        %v1411 = vor.u32 %v1406, %v1410
        %v1413 = vshll.u32 %v1350, 16
        %v1415 = vrot.slane %v1413, 1
        %v1416 = vsel %vm240, %v1411, %v1415
        %v1418 = vshrl.u32 %v1351, 16
        %v1420 = vshll.u32 %v1351, 16
        %v1422 = vrot.slane %v1420, 1
        %v1423 = vor.u32 %v1418, %v1422
        %v1425 = vshll.u32 %v1352, 16
        %v1427 = vrot.slane %v1425, 1
        %v1428 = vsel %vm240, %v1423, %v1427
        %v1430 = vshrl.u32 %v1353, 16
        %v1432 = vshll.u32 %v1353, 16
        %v1434 = vrot.slane %v1432, 1
        %v1435 = vor.u32 %v1430, %v1434
        %v1437 = vshll.u32 %v1354, 16
        %v1439 = vrot.slane %v1437, 1
        %v1440 = vsel %vm240, %v1435, %v1439
        %v1442 = vshrl.u32 %v1355, 16
        %v1444 = vshll.u32 %v1355, 16
        %v1446 = vrot.slane %v1444, 1
        %v1447 = vor.u32 %v1442, %v1446
        %v1449 = vshll.u32 %v1356, 16
        %v1451 = vrot.slane %v1449, 1
        %v1452 = vsel %vm240, %v1447, %v1451
        %v1477 = vrot.slane %v1341, 1
        %v1478 = vrot.slane %v1342, 1
        %v1479 = vsel %vm361, %v1477, %v1478
        %v1480 = vrot.slane %v1343, 1
        %v1481 = vrot.slane %v1344, 1
        %v1482 = vsel %vm361, %v1480, %v1481
        %v1483 = vrot.slane %v1345, 1
        %v1484 = vrot.slane %v1346, 1
        %v1485 = vsel %vm361, %v1483, %v1484
        %v1486 = vrot.slane %v1347, 1
        %v1487 = vrot.slane %v1348, 1
        %v1488 = vsel %vm361, %v1486, %v1487
        %v1489 = vrot.slane %v1349, 1
        %v1490 = vrot.slane %v1350, 1
        %v1491 = vsel %vm361, %v1489, %v1490
        %v1492 = vrot.slane %v1351, 1
        %v1493 = vrot.slane %v1352, 1
        %v1494 = vsel %vm361, %v1492, %v1493
        %v1495 = vrot.slane %v1353, 1
        %v1496 = vrot.slane %v1354, 1
        %v1497 = vsel %vm361, %v1495, %v1496
        %v1498 = vrot.slane %v1355, 1
        %v1499 = vrot.slane %v1356, 1
        %v1500 = vsel %vm361, %v1498, %v1499
        %s1509 = scalar_lea.vmem [#allocation4], 384
        %v1510 = vld [vmem:[%s1509] sm:$0xf]
        %v1511 = vld [vmem:[%s1509 + $0x4] sm:$0xf]
        %v1512 = vld [vmem:[%s1509 + $0x8] sm:$0xf]
        %v1513 = vld [vmem:[%s1509 + $0xc] sm:$0xf]
        %v1514 = vld [vmem:[%s1509 + $0x10] sm:$0xf]
        %v1515 = vld [vmem:[%s1509 + $0x14] sm:$0xf]
        %v1516 = vld [vmem:[%s1509 + $0x18] sm:$0xf]
        %v1517 = vld [vmem:[%s1509 + $0x1c] sm:$0xf]
        %v1518 = vld [vmem:[%s1509 + $0x20] sm:$0xf]
        %v1519 = vld [vmem:[%s1509 + $0x24] sm:$0xf]
        %v1520 = vld [vmem:[%s1509 + $0x28] sm:$0xf]
        %v1521 = vld [vmem:[%s1509 + $0x2c] sm:$0xf]
        %v1522 = vld [vmem:[%s1509 + $0x30] sm:$0xf]
        %v1523 = vld [vmem:[%s1509 + $0x34] sm:$0xf]
        %v1524 = vld [vmem:[%s1509 + $0x38] sm:$0xf]
        %v1525 = vld [vmem:[%s1509 + $0x3c] sm:$0xf]
        %v1526 = vld [vmem:[%s1509 + $0x40] sm:$0xf]
        %v1527 = vld [vmem:[%s1509 + $0x44] sm:$0xf]
        %v1528 = vld [vmem:[%s1509 + $0x48] sm:$0xf]
        %v1529 = vld [vmem:[%s1509 + $0x4c] sm:$0xf]
        %v1530 = vld [vmem:[%s1509 + $0x50] sm:$0xf]
        %v1531 = vld [vmem:[%s1509 + $0x54] sm:$0xf]
        %v1532 = vld [vmem:[%s1509 + $0x58] sm:$0xf]
        %v1533 = vld [vmem:[%s1509 + $0x5c] sm:$0xf]
        %v1534 = vld [vmem:[%s1509 + $0x60] sm:$0xf]
        %v1535 = vld [vmem:[%s1509 + $0x64] sm:$0xf]
        %v1536 = vld [vmem:[%s1509 + $0x68] sm:$0xf]
        %v1537 = vld [vmem:[%s1509 + $0x6c] sm:$0xf]
        %v1538 = vld [vmem:[%s1509 + $0x70] sm:$0xf]
        %v1539 = vld [vmem:[%s1509 + $0x74] sm:$0xf]
        %v1540 = vld [vmem:[%s1509 + $0x78] sm:$0xf]
        %v1541 = vld [vmem:[%s1509 + $0x7c] sm:$0xf]
        %v1542 = vld [vmem:[%s1509 + $0x80] sm:$0xf]
        %v1543 = vld [vmem:[%s1509 + $0x84] sm:$0xf]
        %v1544 = vld [vmem:[%s1509 + $0x88] sm:$0xf]
        %v1545 = vld [vmem:[%s1509 + $0x8c] sm:$0xf]
        %v1546 = vld [vmem:[%s1509 + $0x90] sm:$0xf]
        %v1547 = vld [vmem:[%s1509 + $0x94] sm:$0xf]
        %v1548 = vld [vmem:[%s1509 + $0x98] sm:$0xf]
        %v1549 = vld [vmem:[%s1509 + $0x9c] sm:$0xf]
        %v1550 = vld [vmem:[%s1509 + $0xa0] sm:$0xf]
        %v1551 = vld [vmem:[%s1509 + $0xa4] sm:$0xf]
        %v1552 = vld [vmem:[%s1509 + $0xa8] sm:$0xf]
        %v1553 = vld [vmem:[%s1509 + $0xac] sm:$0xf]
        %v1554 = vld [vmem:[%s1509 + $0xb0] sm:$0xf]
        %v1555 = vld [vmem:[%s1509 + $0xb4] sm:$0xf]
        %v1556 = vld [vmem:[%s1509 + $0xb8] sm:$0xf]
        %v1557 = vld [vmem:[%s1509 + $0xbc] sm:$0xf]
        %v1606 = vunpack.c.l.b16 %v1510
        %v1607 = vunpack.c.l.b16 %v1511
        %v1608 = vunpack.c.l.b16 %v1512
        %v1609 = vunpack.c.l.b16 %v1513
        %v1610 = vunpack.c.l.b16 %v1514
        %v1611 = vunpack.c.l.b16 %v1515
        %v1612 = vunpack.c.l.b16 %v1516
        %v1613 = vunpack.c.l.b16 %v1517
        %v1614 = vunpack.c.l.b16 %v1518
        %v1615 = vunpack.c.l.b16 %v1519
        %v1616 = vunpack.c.l.b16 %v1520
        %v1617 = vunpack.c.l.b16 %v1521
        %v1618 = vunpack.c.l.b16 %v1522
        %v1619 = vunpack.c.l.b16 %v1523
        %v1620 = vunpack.c.l.b16 %v1524
        %v1621 = vunpack.c.l.b16 %v1525
        %v1622 = vunpack.c.l.b16 %v1526
        %v1623 = vunpack.c.l.b16 %v1527
        %v1624 = vunpack.c.l.b16 %v1528
        %v1625 = vunpack.c.l.b16 %v1529
        %v1626 = vunpack.c.l.b16 %v1530
        %v1627 = vunpack.c.l.b16 %v1531
        %v1628 = vunpack.c.l.b16 %v1532
        %v1629 = vunpack.c.l.b16 %v1533
        %v1630 = vunpack.c.l.b16 %v1534
        %v1631 = vunpack.c.l.b16 %v1535
        %v1632 = vunpack.c.l.b16 %v1536
        %v1633 = vunpack.c.l.b16 %v1537
        %v1634 = vunpack.c.l.b16 %v1538
        %v1635 = vunpack.c.l.b16 %v1539
        %v1636 = vunpack.c.l.b16 %v1540
        %v1637 = vunpack.c.l.b16 %v1541
        %v1638 = vunpack.c.l.b16 %v1542
        %v1639 = vunpack.c.l.b16 %v1543
        %v1640 = vunpack.c.l.b16 %v1544
        %v1641 = vunpack.c.l.b16 %v1545
        %v1642 = vunpack.c.l.b16 %v1546
        %v1643 = vunpack.c.l.b16 %v1547
        %v1644 = vunpack.c.l.b16 %v1548
        %v1645 = vunpack.c.l.b16 %v1549
        %v1646 = vunpack.c.l.b16 %v1550
        %v1647 = vunpack.c.l.b16 %v1551
        %v1648 = vunpack.c.l.b16 %v1552
        %v1649 = vunpack.c.l.b16 %v1553
        %v1650 = vunpack.c.l.b16 %v1554
        %v1651 = vunpack.c.l.b16 %v1555
        %v1652 = vunpack.c.l.b16 %v1556
        %v1653 = vunpack.c.l.b16 %v1557
        %v1654 = vpack.c.b16 %v1607, %v1606
        %v1655 = vpack.c.b16 %v1609, %v1608
        %v1656 = vpack.c.b16 %v1611, %v1610
        %v1657 = vpack.c.b16 %v1613, %v1612
        %v1658 = vpack.c.b16 %v1615, %v1614
        %v1659 = vpack.c.b16 %v1617, %v1616
        %v1660 = vpack.c.b16 %v1619, %v1618
        %v1661 = vpack.c.b16 %v1621, %v1620
        %v1662 = vpack.c.b16 %v1623, %v1622
        %v1663 = vpack.c.b16 %v1625, %v1624
        %v1664 = vpack.c.b16 %v1627, %v1626
        %v1665 = vpack.c.b16 %v1629, %v1628
        %v1666 = vpack.c.b16 %v1631, %v1630
        %v1667 = vpack.c.b16 %v1633, %v1632
        %v1668 = vpack.c.b16 %v1635, %v1634
        %v1669 = vpack.c.b16 %v1637, %v1636
        %v1670 = vpack.c.b16 %v1639, %v1638
        %v1671 = vpack.c.b16 %v1641, %v1640
        %v1672 = vpack.c.b16 %v1643, %v1642
        %v1673 = vpack.c.b16 %v1645, %v1644
        %v1674 = vpack.c.b16 %v1647, %v1646
        %v1675 = vpack.c.b16 %v1649, %v1648
        %v1676 = vpack.c.b16 %v1651, %v1650
        %v1677 = vpack.c.b16 %v1653, %v1652
        %1702 = vmatprep.subr.bf16.mxu0 0
        %1703 = vmatpush1.bf16.msra.mxu0 %v1654
        %1704 = vmatprep.subr.bf16.mxu0 0
        %1705 = vmatpush1.bf16.msra.mxu0 %v1655
        %1706 = vmatprep.subr.bf16.mxu0 0
        %1707 = vmatpush1.bf16.msra.mxu0 %v1656
        %1708 = vmatprep.subr.bf16.mxu0 0
        %1709 = vmatpush1.bf16.msra.mxu0 %v1657
        %1710 = vmatprep.subr.bf16.mxu0 0
        %1711 = vmatpush1.bf16.msra.mxu0 %v1658
        %1712 = vmatprep.subr.bf16.mxu0 0
        %1713 = vmatpush1.bf16.msra.mxu0 %v1659
        %1714 = vmatprep.subr.bf16.mxu0 0
        %1715 = vmatpush1.bf16.msra.mxu0 %v1660
        %1716 = vmatprep.subr.bf16.mxu0 0
        %1717 = vmatpush1.bf16.msra.mxu0 %v1661
        %1718 = vmatprep.subr.bf16.mxu0 0
        %1719 = vmatpush1.bf16.msra.mxu0 %v1662
        %1720 = vmatprep.subr.bf16.mxu0 0
        %1721 = vmatpush1.bf16.msra.mxu0 %v1663
        %1722 = vmatprep.subr.bf16.mxu0 0
        %1723 = vmatpush1.bf16.msra.mxu0 %v1664
        %1724 = vmatprep.subr.bf16.mxu0 0
        %1725 = vmatpush1.bf16.msra.mxu0 %v1665
        %1726 = vmatprep.subr.bf16.mxu0 0
        %1727 = vmatpush1.bf16.msra.mxu0 %v1666
        %1728 = vmatprep.subr.bf16.mxu0 0
        %1729 = vmatpush1.bf16.msra.mxu0 %v1667
        %1730 = vmatprep.subr.bf16.mxu0 0
        %1731 = vmatpush1.bf16.msra.mxu0 %v1668
        %1732 = vmatprep.subr.bf16.mxu0 0
        %1733 = vmatpush1.bf16.msra.mxu0 %v1669
        %1734 = vmatprep.mubr.bf16.mxu0 %v1368
        %1735 = vmatmul.mubr.bf16.gmra.mrb[0].mxu0 %v1341
        %v1736 = vpop.f32.mrb[0].mxu0
        %v1737 = vadd.f32 0.0, %v1736
        %v1738 = vpop.f32.mrb[0].mxu0
        %v1739 = vpop.f32.mrb[0].mxu0
        %v1740 = vadd.f32 0.0, %v1739
        %v1741 = vpop.f32.mrb[0].mxu0
        %1742 = vmatprep.mubr.bf16.mxu0 %v1380
        %1743 = vmatmul.mubr.bf16.gmra.mrb[0].mxu0 %v1343
        %v1744 = vpop.f32.mrb[0].mxu0
        %v1745 = vadd.f32 0.0, %v1744
        %v1746 = vpop.f32.mrb[0].mxu0
        %v1747 = vpop.f32.mrb[0].mxu0
        %v1748 = vadd.f32 0.0, %v1747
        %v1749 = vpop.f32.mrb[0].mxu0
        %1750 = vmatprep.mubr.bf16.mxu0 %v1392
        %1751 = vmatmul.mubr.bf16.gmra.mrb[0].mxu0 %v1345
        %v1752 = vpop.f32.mrb[0].mxu0
        %v1753 = vadd.f32 0.0, %v1752
        %v1754 = vpop.f32.mrb[0].mxu0
        %v1755 = vpop.f32.mrb[0].mxu0
        %v1756 = vadd.f32 0.0, %v1755
        %v1757 = vpop.f32.mrb[0].mxu0
        %1758 = vmatprep.mubr.bf16.mxu0 %v1404
        %1759 = vmatmul.mubr.bf16.gmra.mrb[0].mxu0 %v1347
        %v1760 = vpop.f32.mrb[0].mxu0
        %v1761 = vadd.f32 0.0, %v1760
        %v1762 = vpop.f32.mrb[0].mxu0
        %v1763 = vpop.f32.mrb[0].mxu0
        %v1764 = vadd.f32 0.0, %v1763
        %v1765 = vpop.f32.mrb[0].mxu0
        %1766 = vmatprep.mubr.bf16.mxu0 %v1416
        %1767 = vmatmul.mubr.bf16.gmra.mrb[0].mxu0 %v1349
        %v1768 = vpop.f32.mrb[0].mxu0
        %v1769 = vadd.f32 0.0, %v1768
        %v1770 = vpop.f32.mrb[0].mxu0
        %v1771 = vpop.f32.mrb[0].mxu0
        %v1772 = vadd.f32 0.0, %v1771
        %v1773 = vpop.f32.mrb[0].mxu0
        %1774 = vmatprep.mubr.bf16.mxu0 %v1428
        %1775 = vmatmul.mubr.bf16.gmra.mrb[0].mxu0 %v1351
        %v1776 = vpop.f32.mrb[0].mxu0
        %v1777 = vadd.f32 0.0, %v1776
        %v1778 = vpop.f32.mrb[0].mxu0
        %v1779 = vpop.f32.mrb[0].mxu0
        %v1780 = vadd.f32 0.0, %v1779
        %v1781 = vpop.f32.mrb[0].mxu0
        %1782 = vmatprep.mubr.bf16.mxu0 %v1440
        %1783 = vmatmul.mubr.bf16.gmra.mrb[0].mxu0 %v1353
        %v1784 = vpop.f32.mrb[0].mxu0
        %v1785 = vadd.f32 0.0, %v1784
        %v1786 = vpop.f32.mrb[0].mxu0
        %v1787 = vpop.f32.mrb[0].mxu0
        %v1788 = vadd.f32 0.0, %v1787
        %v1789 = vpop.f32.mrb[0].mxu0
        %1790 = vmatprep.mubr.bf16.mxu0 %v1452
        %1791 = vmatmul.mubr.bf16.gmra.mrb[0].mxu0 %v1355
        %v1792 = vpop.f32.mrb[0].mxu0
        %v1793 = vadd.f32 0.0, %v1792
        %v1794 = vpop.f32.mrb[0].mxu0
        %v1795 = vpop.f32.mrb[0].mxu0
        %v1796 = vadd.f32 0.0, %v1795
        %v1797 = vpop.f32.mrb[0].mxu0
        %1798 = vdwg.mxu0
        %1799 = vmatprep.subr.bf16.mxu0 0
        %1800 = vmatpush1.bf16.msra.mxu0 %v1670
        %1801 = vmatprep.subr.bf16.mxu0 0
        %1802 = vmatpush1.bf16.msra.mxu0 %v1671
        %1803 = vmatprep.subr.bf16.mxu0 0
        %1804 = vmatpush1.bf16.msra.mxu0 %v1672
        %1805 = vmatprep.subr.bf16.mxu0 0
        %1806 = vmatpush1.bf16.msra.mxu0 %v1673
        %1807 = vmatprep.subr.bf16.mxu0 0
        %1808 = vmatpush1.bf16.msra.mxu0 %v1674
        %1809 = vmatprep.subr.bf16.mxu0 0
        %1810 = vmatpush1.bf16.msra.mxu0 %v1675
        %1811 = vmatprep.subr.bf16.mxu0 0
        %1812 = vmatpush1.bf16.msra.mxu0 %v1676
        %1813 = vmatprep.subr.bf16.mxu0 0
        %1814 = vmatpush1.bf16.msra.mxu0 %v1677
        %1815 = vmatprep.subr.bf16.mxu0 0
        %1816 = vmatpush1.bf16.msra.mxu0 0
        %1817 = vmatprep.subr.bf16.mxu0 0
        %1818 = vmatpush1.bf16.msra.mxu0 0
        %1819 = vmatprep.subr.bf16.mxu0 0
        %1820 = vmatpush1.bf16.msra.mxu0 0
        %1821 = vmatprep.subr.bf16.mxu0 0
        %1822 = vmatpush1.bf16.msra.mxu0 0
        %1823 = vmatprep.subr.bf16.mxu0 0
        %1824 = vmatpush1.bf16.msra.mxu0 0
        %1825 = vmatprep.subr.bf16.mxu0 0
        %1826 = vmatpush1.bf16.msra.mxu0 0
        %1827 = vmatprep.subr.bf16.mxu0 0
        %1828 = vmatpush1.bf16.msra.mxu0 0
        %1829 = vmatprep.subr.bf16.mxu0 0
        %1830 = vmatpush1.bf16.msra.mxu0 0
        %1831 = vmatprep.mubr.bf16.mxu0 0
        %1832 = vmatmul.mubr.bf16.gmra.mrb[0].mxu0 %v1479
        %v1833 = vpop.f32.mrb[0].mxu0
        %v1834 = vadd.f32 %v1737, %v1833
        %v1835 = vpop.f32.mrb[0].mxu0
        %v1836 = vpop.f32.mrb[0].mxu0
        %v1837 = vadd.f32 %v1740, %v1836
        %v1838 = vpop.f32.mrb[0].mxu0
        %1839 = vmatprep.mubr.bf16.mxu0 0
        %1840 = vmatmul.mubr.bf16.gmra.mrb[0].mxu0 %v1482
        %v1841 = vpop.f32.mrb[0].mxu0
        %v1842 = vadd.f32 %v1745, %v1841
        %v1843 = vpop.f32.mrb[0].mxu0
        %v1844 = vpop.f32.mrb[0].mxu0
        %v1845 = vadd.f32 %v1748, %v1844
        %v1846 = vpop.f32.mrb[0].mxu0
        %1847 = vmatprep.mubr.bf16.mxu0 0
        %1848 = vmatmul.mubr.bf16.gmra.mrb[0].mxu0 %v1485
        %v1849 = vpop.f32.mrb[0].mxu0
        %v1850 = vadd.f32 %v1753, %v1849
        %v1851 = vpop.f32.mrb[0].mxu0
        %v1852 = vpop.f32.mrb[0].mxu0
        %v1853 = vadd.f32 %v1756, %v1852
        %v1854 = vpop.f32.mrb[0].mxu0
        %1855 = vmatprep.mubr.bf16.mxu0 0
        %1856 = vmatmul.mubr.bf16.gmra.mrb[0].mxu0 %v1488
        %v1857 = vpop.f32.mrb[0].mxu0
        %v1858 = vadd.f32 %v1761, %v1857
        %v1859 = vpop.f32.mrb[0].mxu0
        %v1860 = vpop.f32.mrb[0].mxu0
        %v1861 = vadd.f32 %v1764, %v1860
        %v1862 = vpop.f32.mrb[0].mxu0
        %1863 = vmatprep.mubr.bf16.mxu0 0
        %1864 = vmatmul.mubr.bf16.gmra.mrb[0].mxu0 %v1491
        %v1865 = vpop.f32.mrb[0].mxu0
        %v1866 = vadd.f32 %v1769, %v1865
        %v1867 = vpop.f32.mrb[0].mxu0
        %v1868 = vpop.f32.mrb[0].mxu0
        %v1869 = vadd.f32 %v1772, %v1868
        %v1870 = vpop.f32.mrb[0].mxu0
        %1871 = vmatprep.mubr.bf16.mxu0 0
        %1872 = vmatmul.mubr.bf16.gmra.mrb[0].mxu0 %v1494
        %v1873 = vpop.f32.mrb[0].mxu0
        %v1874 = vadd.f32 %v1777, %v1873
        %v1875 = vpop.f32.mrb[0].mxu0
        %v1876 = vpop.f32.mrb[0].mxu0
        %v1877 = vadd.f32 %v1780, %v1876
        %v1878 = vpop.f32.mrb[0].mxu0
        %1879 = vmatprep.mubr.bf16.mxu0 0
        %1880 = vmatmul.mubr.bf16.gmra.mrb[0].mxu0 %v1497
        %v1881 = vpop.f32.mrb[0].mxu0
        %v1882 = vadd.f32 %v1785, %v1881
        %v1883 = vpop.f32.mrb[0].mxu0
        %v1884 = vpop.f32.mrb[0].mxu0
        %v1885 = vadd.f32 %v1788, %v1884
        %v1886 = vpop.f32.mrb[0].mxu0
        %1887 = vmatprep.mubr.bf16.mxu0 0
        %1888 = vmatmul.mubr.bf16.gmra.mrb[0].mxu0 %v1500
        %v1889 = vpop.f32.mrb[0].mxu0
        %v1890 = vadd.f32 %v1793, %v1889
        %v1891 = vpop.f32.mrb[0].mxu0
        %v1892 = vpop.f32.mrb[0].mxu0
        %v1893 = vadd.f32 %v1796, %v1892
        %v1894 = vpop.f32.mrb[0].mxu0
        %1895 = vdwg.mxu0
        %v1896 = vadd.f32 %v1276, %v1834
        %v1897 = vadd.f32 %v1279, %v1837
        %v1898 = vadd.f32 %v1284, %v1842
        %v1899 = vadd.f32 %v1287, %v1845
        %v1900 = vadd.f32 %v1292, %v1850
        %v1901 = vadd.f32 %v1295, %v1853
        %v1902 = vadd.f32 %v1300, %v1858
        %v1903 = vadd.f32 %v1303, %v1861
        %v1904 = vadd.f32 %v1308, %v1866
        %v1905 = vadd.f32 %v1311, %v1869
        %v1906 = vadd.f32 %v1316, %v1874
        %v1907 = vadd.f32 %v1319, %v1877
        %v1908 = vadd.f32 %v1324, %v1882
        %v1909 = vadd.f32 %v1327, %v1885
        %v1910 = vadd.f32 %v1332, %v1890
        %v1911 = vadd.f32 %v1335, %v1893
        %v1912 = vld [vmem:[%s2] sm:$0x1]
        %v1914 = vlaneseq
        %v1915 = vshrl.u32 %v1914, 7
        %v1916 = vsub.s32 0, %v1915
        %v1917 = vrot.slane %v1912, %v1916
        %v1919 = vadd.f32 %v1896, %v1917
        %v1920 = vadd.f32 %v1897, %v1917
        %v1921 = vadd.f32 %v1898, %v1917
        %v1922 = vadd.f32 %v1899, %v1917
        %v1923 = vadd.f32 %v1900, %v1917
        %v1924 = vadd.f32 %v1901, %v1917
        %v1925 = vadd.f32 %v1902, %v1917
        %v1926 = vadd.f32 %v1903, %v1917
        %v1927 = vadd.f32 %v1904, %v1917
        %v1928 = vadd.f32 %v1905, %v1917
        %v1929 = vadd.f32 %v1906, %v1917
        %v1930 = vadd.f32 %v1907, %v1917
        %v1931 = vadd.f32 %v1908, %v1917
        %v1932 = vadd.f32 %v1909, %v1917
        %v1933 = vadd.f32 %v1910, %v1917
        %v1934 = vadd.f32 %v1911, %v1917
        %v1935 = vxor.u32 %v1919, 2147483648
        %v1936 = vxor.u32 %v1920, 2147483648
        %v1937 = vxor.u32 %v1921, 2147483648
        %v1938 = vxor.u32 %v1922, 2147483648
        %v1939 = vxor.u32 %v1923, 2147483648
        %v1940 = vxor.u32 %v1924, 2147483648
        %v1941 = vxor.u32 %v1925, 2147483648
        %v1942 = vxor.u32 %v1926, 2147483648
        %v1943 = vxor.u32 %v1927, 2147483648
        %v1944 = vxor.u32 %v1928, 2147483648
        %v1945 = vxor.u32 %v1929, 2147483648
        %v1946 = vxor.u32 %v1930, 2147483648
        %v1947 = vxor.u32 %v1931, 2147483648
        %v1948 = vxor.u32 %v1932, 2147483648
        %v1949 = vxor.u32 %v1933, 2147483648
        %v1950 = vxor.u32 %v1934, 2147483648
        %v1951 = vmul.f32 %v1935, 1.442695
        %v1952 = vpow.pop %v1951
        %v1953 = vmul.f32 %v1936, 1.442695
        %v1954 = vpow.pop %v1953
        %v1955 = vmul.f32 %v1937, 1.442695
        %v1956 = vpow.pop %v1955
        %v1957 = vmul.f32 %v1938, 1.442695
        %v1958 = vpow.pop %v1957
        %v1959 = vmul.f32 %v1939, 1.442695
        %v1960 = vpow.pop %v1959
        %v1961 = vmul.f32 %v1940, 1.442695
        %v1962 = vpow.pop %v1961
        %v1963 = vmul.f32 %v1941, 1.442695
        %v1964 = vpow.pop %v1963
        %v1965 = vmul.f32 %v1942, 1.442695
        %v1966 = vpow.pop %v1965
        %v1967 = vmul.f32 %v1943, 1.442695
        %v1968 = vpow.pop %v1967
        %v1969 = vmul.f32 %v1944, 1.442695
        %v1970 = vpow.pop %v1969
        %v1971 = vmul.f32 %v1945, 1.442695
        %v1972 = vpow.pop %v1971
        %v1973 = vmul.f32 %v1946, 1.442695
        %v1974 = vpow.pop %v1973
        %v1975 = vmul.f32 %v1947, 1.442695
        %v1976 = vpow.pop %v1975
        %v1977 = vmul.f32 %v1948, 1.442695
        %v1978 = vpow.pop %v1977
        %v1979 = vmul.f32 %v1949, 1.442695
        %v1980 = vpow.pop %v1979
        %v1981 = vmul.f32 %v1950, 1.442695
        %v1982 = vpow.pop %v1981
        %v1983 = vadd.f32 %v1952, 1.0
        %v1984 = vadd.f32 %v1954, 1.0
        %v1985 = vadd.f32 %v1956, 1.0
        %v1986 = vadd.f32 %v1958, 1.0
        %v1987 = vadd.f32 %v1960, 1.0
        %v1988 = vadd.f32 %v1962, 1.0
        %v1989 = vadd.f32 %v1964, 1.0
        %v1990 = vadd.f32 %v1966, 1.0
        %v1991 = vadd.f32 %v1968, 1.0
        %v1992 = vadd.f32 %v1970, 1.0
        %v1993 = vadd.f32 %v1972, 1.0
        %v1994 = vadd.f32 %v1974, 1.0
        %v1995 = vadd.f32 %v1976, 1.0
        %v1996 = vadd.f32 %v1978, 1.0
        %v1997 = vadd.f32 %v1980, 1.0
        %v1998 = vadd.f32 %v1982, 1.0
        %v1999 = vrcp.pop %v1983
        %v2000 = vmul.f32 1.0, %v1999
        %v2001 = vrcp.pop %v1984
        %v2002 = vmul.f32 1.0, %v2001
        %v2003 = vrcp.pop %v1985
        %v2004 = vmul.f32 1.0, %v2003
        %v2005 = vrcp.pop %v1986
        %v2006 = vmul.f32 1.0, %v2005
        %v2007 = vrcp.pop %v1987
        %v2008 = vmul.f32 1.0, %v2007
        %v2009 = vrcp.pop %v1988
        %v2010 = vmul.f32 1.0, %v2009
        %v2011 = vrcp.pop %v1989
        %v2012 = vmul.f32 1.0, %v2011
        %v2013 = vrcp.pop %v1990
        %v2014 = vmul.f32 1.0, %v2013
        %v2015 = vrcp.pop %v1991
        %v2016 = vmul.f32 1.0, %v2015
        %v2017 = vrcp.pop %v1992
        %v2018 = vmul.f32 1.0, %v2017
        %v2019 = vrcp.pop %v1993
        %v2020 = vmul.f32 1.0, %v2019
        %v2021 = vrcp.pop %v1994
        %v2022 = vmul.f32 1.0, %v2021
        %v2023 = vrcp.pop %v1995
        %v2024 = vmul.f32 1.0, %v2023
        %v2025 = vrcp.pop %v1996
        %v2026 = vmul.f32 1.0, %v2025
        %v2027 = vrcp.pop %v1997
        %v2028 = vmul.f32 1.0, %v2027
        %v2029 = vrcp.pop %v1998
        %v2030 = vmul.f32 1.0, %v2029
        %v2031 = vmul.f32 %v1919, %v2000
        %v2032 = vmul.f32 %v1920, %v2002
        %v2033 = vmul.f32 %v1921, %v2004
        %v2034 = vmul.f32 %v1922, %v2006
        %v2035 = vmul.f32 %v1923, %v2008
        %v2036 = vmul.f32 %v1924, %v2010
        %v2037 = vmul.f32 %v1925, %v2012
        %v2038 = vmul.f32 %v1926, %v2014
        %v2039 = vmul.f32 %v1927, %v2016
        %v2040 = vmul.f32 %v1928, %v2018
        %v2041 = vmul.f32 %v1929, %v2020
        %v2042 = vmul.f32 %v1930, %v2022
        %v2043 = vmul.f32 %v1931, %v2024
        %v2044 = vmul.f32 %v1932, %v2026
        %v2045 = vmul.f32 %v1933, %v2028
        %v2046 = vmul.f32 %v1934, %v2030
        %v2047 = vpack.c.bf16 %v2032, %v2031
        %v2048 = vpack.c.bf16 %v2034, %v2033
        %v2049 = vpack.c.bf16 %v2036, %v2035
        %v2050 = vpack.c.bf16 %v2038, %v2037
        %v2051 = vpack.c.bf16 %v2040, %v2039
        %v2052 = vpack.c.bf16 %v2042, %v2041
        %v2053 = vpack.c.bf16 %v2044, %v2043
        %v2054 = vpack.c.bf16 %v2046, %v2045
        %v2063 = vunpack.c.l.b16 %v2047
        %v2064 = vunpack.c.h.b16 %v2047
        %v2065 = vunpack.c.l.b16 %v2048
        %v2066 = vunpack.c.h.b16 %v2048
        %v2067 = vunpack.c.l.b16 %v2049
        %v2068 = vunpack.c.h.b16 %v2049
        %v2069 = vunpack.c.l.b16 %v2050
        %v2070 = vunpack.c.h.b16 %v2050
        %v2071 = vunpack.c.l.b16 %v2051
        %v2072 = vunpack.c.h.b16 %v2051
        %v2073 = vunpack.c.l.b16 %v2052
        %v2074 = vunpack.c.h.b16 %v2052
        %v2075 = vunpack.c.l.b16 %v2053
        %v2076 = vunpack.c.h.b16 %v2053
        %v2077 = vunpack.c.l.b16 %v2054
        %v2078 = vunpack.c.h.b16 %v2054
        %v2079 = vpack.c.b16 %v2063, %v2063
        %v2080 = vpack.c.b16 %v2064, %v2064
        %v2081 = vpack.c.b16 %v2065, %v2065
        %v2082 = vpack.c.b16 %v2066, %v2066
        %v2083 = vpack.c.b16 %v2067, %v2067
        %v2084 = vpack.c.b16 %v2068, %v2068
        %v2085 = vpack.c.b16 %v2069, %v2069
        %v2086 = vpack.c.b16 %v2070, %v2070
        %v2087 = vpack.c.b16 %v2071, %v2071
        %v2088 = vpack.c.b16 %v2072, %v2072
        %v2089 = vpack.c.b16 %v2073, %v2073
        %v2090 = vpack.c.b16 %v2074, %v2074
        %v2091 = vpack.c.b16 %v2075, %v2075
        %v2092 = vpack.c.b16 %v2076, %v2076
        %v2093 = vpack.c.b16 %v2077, %v2077
        %v2094 = vpack.c.b16 %v2078, %v2078
        %2111 = vst [vmem:[%s151] sm:$0xf] %v2079
        %2112 = vst [vmem:[%s151 + $0x4] sm:$0xf] %v2080
        %2113 = vst [vmem:[%s151 + $0x8] sm:$0xf] %v2081
        %2114 = vst [vmem:[%s151 + $0xc] sm:$0xf] %v2082
        %2115 = vst [vmem:[%s151 + $0x10] sm:$0xf] %v2083
        %2116 = vst [vmem:[%s151 + $0x14] sm:$0xf] %v2084
        %2117 = vst [vmem:[%s151 + $0x18] sm:$0xf] %v2085
        %2118 = vst [vmem:[%s151 + $0x1c] sm:$0xf] %v2086
        %2119 = vst [vmem:[%s151 + $0x20] sm:$0xf] %v2087
        %2120 = vst [vmem:[%s151 + $0x24] sm:$0xf] %v2088
        %2121 = vst [vmem:[%s151 + $0x28] sm:$0xf] %v2089
        %2122 = vst [vmem:[%s151 + $0x2c] sm:$0xf] %v2090
        %2123 = vst [vmem:[%s151 + $0x30] sm:$0xf] %v2091
        %2124 = vst [vmem:[%s151 + $0x34] sm:$0xf] %v2092
        %2125 = vst [vmem:[%s151 + $0x38] sm:$0xf] %v2093
        %2126 = vst [vmem:[%s151 + $0x3c] sm:$0xf] %v2094
        %s2127 = sand.u32 %s82, 1
        %s2128 = scalar_lea.sflag [#allocation6], %s2127
        %s2129 = sand.u32 %s82, 1
        %s2130 = smul.addr %s2129, 64
        %s2131 = scalar_lea.vmem [#allocation7], %s2130
        // Predicated region
        $region49: #{tpu_custom_call.1} parent=27 // pred_check
          %p2132 = pneg %p92
        $region50: #{tpu_custom_call.1} parent=27 // pred_check_branch
          %2134 = sbr.rel (%p2132) target = $region52
        $region51: #{tpu_custom_call.1} parent=27 // pred_region
          %s2135 = smul.u32 16, %s23
          %s2137 = ssub.s32 1024, 1024
          %2138 = vsyncadd %s2128, %s2137
          %s2139 = smul.addr %s22, 32
          %s2140 = sadd.s32 %s2135, %s2139
          %s2141 = smul.addr %s2140, 64
          %s2142 = scalar_lea.hbm %s3, %s2141
          %s2143 = sshll.u32 %s2131, 4
          %s2144 = int_to_ptr.vmem [resolvable:$true] %s2143
          %2149 = dma.vmem_to_hbm [thread:$0]  %s2144, 1024, %s2142, %s2128, 64, 64, 4
        $region52: #{tpu_custom_call.1} parent=27 // pred_fallthru
          _
      $region28: #{tpu_custom_call.1} parent=5 // pred_fallthru
        _
      %p2150 = scmp.le.s32.totalorder 2, %s13
      // Predicated region
      $region53: #{tpu_custom_call.1} parent=5 // pred_check
        %p2151 = pneg %p2150
      $region54: #{tpu_custom_call.1} parent=5 // pred_check_branch
        %2153 = sbr.rel (%p2151) target = $region56
      $region55: #{tpu_custom_call.1} parent=5 // pred_region
        %s2154 = ssub.s32 %s13, 2
        // Predicated region
        $region57: #{tpu_custom_call.1} parent=55 // pred_check
          %p2155 = pneg %p98
        $region58: #{tpu_custom_call.1} parent=55 // pred_check_branch
          %2157 = sbr.rel (%p2155) target = $region60
        $region59: #{tpu_custom_call.1} parent=55 // pred_region
          %s2158 = sand.u32 %s83, 1
          %s2159 = scalar_lea.sflag [#allocation6], %s2158
          %s2160 = sand.u32 %s83, 1
          %s2161 = smul.addr %s2160, 64
          %s2162 = scalar_lea.vmem [#allocation7], %s2161
          %2163 = dma.done %s2159, 1024
        $region60: #{tpu_custom_call.1} parent=55 // pred_fallthru
          _
      $region56: #{tpu_custom_call.1} parent=5 // pred_fallthru
        _
    $region6: #{tpu_custom_call.1} parent=1 // loop_footer
      %s17 = sadd.s32 1, %s13
    $region7: #{tpu_custom_call.1} parent=1 // loop_footer_branch
      %12 = sbr.rel target = $region3
    $region8: #{tpu_custom_call.1} parent=1 // loop_exit
      _
    %2164 = vsyncpa [#allocation5], 1
    %s2165 = scalar_lea.sflag [#allocation5], 1
    %2166 = vsyncpa %s2165, 1
    %2167 = vsyncpa [#allocation6], 1
    %s2168 = scalar_lea.sflag [#allocation6], 1
    %2169 = vsyncpa %s2168, 1
  %2170 = vsyncmov [#allocation3]
  %s2171 = vpop.sfrf %2170
  %p2172 = scmp.eq.s32.totalorder %s2171, 0
  %p2173 = pneg %p2172
  %2175 = shalt.err (%p2173)
  %s2176 = scalar_lea.sflag [#allocation3], 1
  %2177 = vsyncmov %s2176
  %s2178 = vpop.sfrf %2177
  %p2179 = scmp.eq.s32.totalorder %s2178, 0
  %p2180 = pneg %p2179
  %2182 = shalt.err (%p2180)

</llo_original>
